<compile_context>
chip_gen: v6e
topology: v6e:2x2x1
jax: 0.10.0
libtpu: 0.0.40
codegen_flags: <defaults>
</compile_context>

<pallas_src>
import functools

import jax
import jax.numpy as jnp
from jax.experimental import pallas as pl
from jax.experimental.pallas import tpu as pltpu


def _round_up(x, m):
    return (x + m - 1) // m * m


def _pick_row_strip(Ho, Wo):
    """Pick TH (output rows per grid step): TH | Ho, TH*Wo ~ a few hundred, >=2 strips."""
    target = max(1, 256 // max(Wo, 1))
    if Ho > 1:
        target = min(target, max(1, Ho // 2))   # keep at least 2 strips for pipelining
    best = 1
    for d in range(1, Ho + 1):
        if Ho % d == 0 and d <= target:
            best = d
    return best


def _mobilenet_block_kernel(x_hbm, dw_ref, s1_ref, b1_ref, pw_ref, s2_ref, b2_ref,
                            o_ref, xbuf, copy_sem, *, stride, th, n_strips, th_in):
    # x_hbm : (N, H+2, W+2, Cin_p)    zero-padded input, stays in HBM (pl.ANY)
    # dw_ref: (3, 3, Cin_p)           depthwise 3x3 weights                (VMEM, resident)
    # s1/b1 : (1, Cin_p)              folded BN1 scale / bias              (VMEM, resident)
    # pw_ref: (Cin_p, Cout_p) bf16    pointwise (1x1) weights              (VMEM, resident)
    # s2/b2 : (1, Cout_p)             folded BN2 scale / bias              (VMEM, resident)
    # o_ref : (1, th, Wo, Cout_p)     output row strip (lane-dense, Cout_p % 128 == 0)
    # xbuf  : (2, th_in, W+2, Cin_p)  double-buffered input strip scratch
    n = pl.program_id(0)       # batch element
    t = pl.program_id(1)       # row strip within the batch element

    _, _, Wo, Cout_p = o_ref.shape
    Cin_p = xbuf.shape[3]

    slot = t % 2

    def start_fetch(strip, slot_idx):
        row0 = strip * th * stride
        pltpu.make_async_copy(
            x_hbm.at[n, pl.ds(row0, th_in)],   # (th_in, W+2, Cin_p) contiguous HBM chunk
            xbuf.at[slot_idx],
            copy_sem.at[slot_idx],
        ).start()

    # First strip of this batch element issues its own fetch (prefetch chain restarts per
    # batch element, so the batch grid axis can be sharded across TensorCores).
    @pl.when(t == 0)
    def _():
        start_fetch(0, 0)

    # Wait for the current strip's DMA.
    pltpu.make_async_copy(
        x_hbm.at[0, pl.ds(0, th_in)], xbuf.at[slot], copy_sem.at[slot]
    ).wait()

    # Prefetch the next strip of the same batch element; overlaps with the compute below.
    @pl.when(t + 1 < n_strips)
    def _():
        start_fetch(t + 1, 1 - slot)

    # ---- depthwise 3x3 conv (unrolled taps, f32 VPU accumulation, full 128-lane vregs) ----
    xf = xbuf[slot].astype(jnp.float32)            # (th_in, W+2, Cin_p)
    dw = dw_ref[...].astype(jnp.float32)           # hoisted load/cast (once per step)

    acc = jnp.zeros((th, Wo, Cin_p), jnp.float32)
    if stride == 1:
        for kh in range(3):
            xh = xf[kh:kh + th]                    # cheap major-axis slice
            for kw in range(3):
                acc = acc + xh[:, kw:kw + Wo, :] * dw[kh, kw]
    else:
        # Generic strided path (not exercised by the stride=1 self-test).
        for kh in range(3):
            for kw in range(3):
                patch = jax.lax.slice(
                    xf,
                    (kh, kw, 0),
                    (kh + stride * (th - 1) + 1, kw + stride * (Wo - 1) + 1, Cin_p),
                    (stride, stride, 1),
                )
                acc = acc + patch * dw[kh, kw]

    # ---- BN1 (folded) + ReLU, then drop to bf16 for the MXU ----
    h = jnp.maximum(acc * s1_ref[0] + b1_ref[0], 0.0)          # (th, Wo, Cin_p) f32
    hm = h.reshape(th * Wo, Cin_p).astype(jnp.bfloat16)

    # ---- pointwise 1x1 conv: bf16 x bf16 MXU matmul, f32 accumulator ----
    y = jnp.dot(hm, pw_ref[...], preferred_element_type=jnp.float32)   # (th*Wo, Cout_p)

    # ---- BN2 (folded) + ReLU ----
    y = jnp.maximum(y * s2_ref[0] + b2_ref[0], 0.0)

    # Lane-dense store (Cout_p is a multiple of 128).
    o_ref[0] = y.reshape(th, Wo, Cout_p).astype(o_ref.dtype)


def mobilenet_block(x_nchw, dw_w, pw_w, scale1, bias1, scale2, bias2, *, stride=1):
    """x_nchw: (N, Cin, H, W). dw_w: (3,3,Cin). pw_w: (Cin,Cout). Returns (N, Cout, Ho, Wo)."""
    N, Cin, H, W = x_nchw.shape
    Cout = pw_w.shape[1]
    Ho = (H + 2 - 3) // stride + 1
    Wo = (W + 2 - 3) // stride + 1

    Cin_p = _round_up(Cin, 128)
    Cout_p = _round_up(Cout, 128)

    th = _pick_row_strip(Ho, Wo)             # output rows per grid step (divides Ho)
    n_strips = Ho // th
    th_in = (th - 1) * stride + 3            # input rows per strip (incl. 2-row halo)

    # Layout glue: NCHW -> NHWC plus ONE combined pad (spatial halo of 1 + channel pad to
    # a 128 multiple).  Padded channels carry zero weights / zero BN scale+bias, so they
    # contribute exactly zero and are sliced off below.
    x_nhwc = jnp.transpose(x_nchw, (0, 2, 3, 1))
    x_pad = jnp.pad(x_nhwc, ((0, 0), (1, 1), (1, 1), (0, Cin_p - Cin)))

    f32 = jnp.float32
    dw_p = jnp.zeros((3, 3, Cin_p), f32).at[:, :, :Cin].set(dw_w.astype(f32))
    pw_p = jnp.zeros((Cin_p, Cout_p), jnp.bfloat16).at[:Cin, :Cout].set(
        pw_w.astype(jnp.bfloat16))
    s1_p = jnp.zeros((1, Cin_p), f32).at[0, :Cin].set(scale1.astype(f32))
    b1_p = jnp.zeros((1, Cin_p), f32).at[0, :Cin].set(bias1.astype(f32))
    s2_p = jnp.zeros((1, Cout_p), f32).at[0, :Cout].set(scale2.astype(f32))
    b2_p = jnp.zeros((1, Cout_p), f32).at[0, :Cout].set(bias2.astype(f32))

    kernel = functools.partial(
        _mobilenet_block_kernel, stride=stride, th=th, n_strips=n_strips, th_in=th_in)

    out_padded = pl.pallas_call(
        kernel,
        out_shape=jax.ShapeDtypeStruct((N, Ho, Wo, Cout_p), x_nchw.dtype),
        grid=(N, n_strips),
        in_specs=[
            pl.BlockSpec(memory_space=pl.ANY),                    # x stays in HBM
            pl.BlockSpec((3, 3, Cin_p), lambda n, t: (0, 0, 0)),  # resident weights/params
            pl.BlockSpec((1, Cin_p), lambda n, t: (0, 0)),
            pl.BlockSpec((1, Cin_p), lambda n, t: (0, 0)),
            pl.BlockSpec((Cin_p, Cout_p), lambda n, t: (0, 0)),
            pl.BlockSpec((1, Cout_p), lambda n, t: (0, 0)),
            pl.BlockSpec((1, Cout_p), lambda n, t: (0, 0)),
        ],
        out_specs=pl.BlockSpec((1, th, Wo, Cout_p), lambda n, t: (n, t, 0, 0)),
        scratch_shapes=[
            pltpu.VMEM((2, th_in, W + 2, Cin_p), x_nchw.dtype),   # double-buffered strips
            pltpu.SemaphoreType.DMA((2,)),
        ],
        compiler_params=pltpu.CompilerParams(
            dimension_semantics=("parallel", "arbitrary")),
    )(x_pad, dw_p, s1_p, b1_p, pw_p, s2_p, b2_p)

    out_nhwc = out_padded[..., :Cout]
    return jnp.transpose(out_nhwc, (0, 3, 1, 2))


def _reference_block(x_nchw, dw_w, pw_w, scale1, bias1, scale2, bias2, *, stride=1):
    """Pure-JAX f32 reference mirroring the PyTorch Block forward (BN in eval mode)."""
    Cin = x_nchw.shape[1]
    dw_oihw = jnp.transpose(dw_w, (2, 0, 1))[:, None, :, :]       # (Cin,1,3,3)
    y = jax.lax.conv_general_dilated(
        x_nchw, dw_oihw, window_strides=(stride, stride),
        padding=((1, 1), (1, 1)), feature_group_count=Cin,
        dimension_numbers=("NCHW", "OIHW", "NCHW"))
    y = jnp.maximum(y * scale1[None, :, None, None] + bias1[None, :, None, None], 0.0)
    pw_oihw = jnp.transpose(pw_w, (1, 0))[:, :, None, None]       # (Cout,Cin,1,1)
    z = jax.lax.conv_general_dilated(
        y, pw_oihw, window_strides=(1, 1), padding=((0, 0), (0, 0)),
        dimension_numbers=("NCHW", "OIHW", "NCHW"))
    z = jnp.maximum(z * scale2[None, :, None, None] + bias2[None, :, None, None], 0.0)
    return z


if __name__ == "__main__":
    key = jax.random.PRNGKey(0)
    N, Cin, Cout, H, W, stride = 2, 8, 16, 16, 16, 1

    keys = jax.random.split(key, 8)
    x = jax.random.normal(keys[0], (N, Cin, H, W), jnp.float32)

    # Deterministic parameter init (shapes per nn.Conv2d / nn.BatchNorm2d in __init__).
    dw_w = jax.random.normal(keys[1], (3, 3, Cin), jnp.float32) * 0.2      # depthwise 3x3
    pw_w = jax.random.normal(keys[2], (Cin, Cout), jnp.float32) * 0.2      # pointwise 1x1
    eps = 1e-5
    gamma1 = jnp.ones((Cin,)) + 0.1 * jax.random.normal(keys[3], (Cin,))
    beta1 = 0.1 * jax.random.normal(keys[4], (Cin,))
    mean1 = 0.1 * jax.random.normal(keys[5], (Cin,))
    var1 = jnp.abs(jax.random.normal(keys[6], (Cin,))) + 1.0
    gamma2 = jnp.ones((Cout,))
    beta2 = jnp.zeros((Cout,))
    mean2 = 0.05 * jax.random.normal(keys[7], (Cout,))
    var2 = jnp.ones((Cout,)) * 1.3

    # Fold BN (inference mode) into per-channel scale / bias.
    scale1 = gamma1 / jnp.sqrt(var1 + eps)
    bias1 = beta1 - mean1 * scale1
    scale2 = gamma2 / jnp.sqrt(var2 + eps)
    bias2 = beta2 - mean2 * scale2

    out = mobilenet_block(x, dw_w, pw_w, scale1, bias1, scale2, bias2, stride=stride)
    out = jax.block_until_ready(out)

    ref = _reference_block(x, dw_w, pw_w, scale1, bias1, scale2, bias2, stride=stride)
    assert out.shape == ref.shape, (out.shape, ref.shape)
    # The kernel uses bf16 MXU operands for the 1x1 conv (f32 accumulation), so compare
    # against the f32 reference with a bf16-appropriate tolerance.
    assert jnp.allclose(out, ref, atol=3e-2, rtol=3e-2), float(jnp.max(jnp.abs(out - ref)))

    print("KERNEL_OK")
</pallas_src>

<mosaic_0001>
module attributes {stable_mosaic.version = 11 : i64} {
  func.func @_mobilenet_block_kernel(%arg0: i32, %arg1: i32, %arg2: memref<2x18x18x128xf32, #tpu.memory_space<any>>, %arg3: memref<3x3x128xf32, #tpu.memory_space<vmem>>, %arg4: memref<1x128xf32, #tpu.memory_space<vmem>>, %arg5: memref<1x128xf32, #tpu.memory_space<vmem>>, %arg6: memref<128x128xbf16, #tpu.memory_space<vmem>>, %arg7: memref<1x128xf32, #tpu.memory_space<vmem>>, %arg8: memref<1x128xf32, #tpu.memory_space<vmem>>, %arg9: memref<1x8x16x128xf32, #tpu.memory_space<vmem>>, %arg10: memref<2x10x18x128xf32, #tpu.memory_space<vmem>>, %arg11: memref<2x!tpu.dma_semaphore, #tpu.memory_space<semaphore_mem>>) attributes {dimension_semantics = [#tpu.dimension_semantics<parallel>, #tpu.dimension_semantics<arbitrary>], iteration_bounds = array<i64: 2, 2>, scalar_prefetch = 0 : i64, scratch_operands = 2 : i64, tpu.core_type = #tpu.core_type<tc>, window_params = [{}, {pipeline_mode = #tpu.pipeline_mode<synchronous>, transform_indices = @transform_1, window_bounds = array<i64: 3, 3, 128>}, {pipeline_mode = #tpu.pipeline_mode<synchronous>, transform_indices = @transform_2, window_bounds = array<i64: 1, 128>}, {pipeline_mode = #tpu.pipeline_mode<synchronous>, transform_indices = @transform_3, window_bounds = array<i64: 1, 128>}, {pipeline_mode = #tpu.pipeline_mode<synchronous>, transform_indices = @transform_4, window_bounds = array<i64: 128, 128>}, {pipeline_mode = #tpu.pipeline_mode<synchronous>, transform_indices = @transform_5, window_bounds = array<i64: 1, 128>}, {pipeline_mode = #tpu.pipeline_mode<synchronous>, transform_indices = @transform_6, window_bounds = array<i64: 1, 128>}, {transform_indices = @transform_7, window_bounds = array<i64: 1, 8, 16, 128>}]} {
    %c2_i32 = arith.constant 2 : i32
    %c0_i32 = arith.constant 0 : i32
    %0 = arith.cmpi eq, %c2_i32, %c0_i32 : i32
    %c1_i32 = arith.constant 1 : i32
    %1 = arith.select %0, %c1_i32, %c2_i32 : i32
    %2 = arith.remsi %arg1, %1 : i32
    %c0_i32_0 = arith.constant 0 : i32
    %3 = arith.cmpi ne, %2, %c0_i32_0 : i32
    %c0_i32_1 = arith.constant 0 : i32
    %4 = arith.cmpi slt, %2, %c0_i32_1 : i32
    %c0_i32_2 = arith.constant 0 : i32
    %5 = arith.cmpi slt, %1, %c0_i32_2 : i32
    %6 = arith.xori %4, %5 : i1
    %7 = arith.andi %6, %3 : i1
    %8 = arith.addi %2, %1 : i32
    %9 = arith.select %7, %8, %2 : i32
    %c0_i32_3 = arith.constant 0 : i32
    %10 = arith.cmpi eq, %arg1, %c0_i32_3 : i32
    %11 = arith.extui %10 : i1 to i32
    %c0_i32_4 = arith.constant 0 : i32
    %12 = arith.cmpi ne, %11, %c0_i32_4 : i32
    scf.if %12 {
      %c0_i32_37 = arith.constant 0 : i32
      %c0_i32_38 = arith.constant 0 : i32
      %c0_i32_39 = arith.constant 0 : i32
      %c0_i32_40 = arith.constant 0 : i32
      %c0_i32_41 = arith.constant 0 : i32
      %126 = tpu.memref_slice %arg2[%arg0, %c0_i32_39, %c0_i32_40, %c0_i32_41] : memref<2x18x18x128xf32, #tpu.memory_space<any>> -> memref<1x10x18x128xf32, #tpu.memory_space<any>>
      %127 = tpu.memref_squeeze %126 : memref<1x10x18x128xf32, #tpu.memory_space<any>> -> memref<10x18x128xf32, #tpu.memory_space<any>>
      %c0_i32_42 = arith.constant 0 : i32
      %c0_i32_43 = arith.constant 0 : i32
      %c0_i32_44 = arith.constant 0 : i32
      %128 = tpu.memref_slice %arg10[%c0_i32_37, %c0_i32_42, %c0_i32_43, %c0_i32_44] : memref<2x10x18x128xf32, #tpu.memory_space<vmem>> -> memref<1x10x18x128xf32, #tpu.memory_space<vmem>>
      %129 = tpu.memref_squeeze %128 : memref<1x10x18x128xf32, #tpu.memory_space<vmem>> -> memref<10x18x128xf32, #tpu.memory_space<vmem>>
      %130 = tpu.memref_slice %arg11[%c0_i32_38] : memref<2x!tpu.dma_semaphore, #tpu.memory_space<semaphore_mem>> -> memref<1x!tpu.dma_semaphore, #tpu.memory_space<semaphore_mem>>
      %131 = tpu.memref_squeeze %130 : memref<1x!tpu.dma_semaphore, #tpu.memory_space<semaphore_mem>> -> memref<!tpu.dma_semaphore, #tpu.memory_space<semaphore_mem>>
      tpu.enqueue_dma source(%127 : memref<10x18x128xf32, #tpu.memory_space<any>>) target(%129 : memref<10x18x128xf32, #tpu.memory_space<vmem>>) target_semaphore(%131 : memref<!tpu.dma_semaphore, #tpu.memory_space<semaphore_mem>>)
    } else {
    }
    %c0_i32_5 = arith.constant 0 : i32
    %c0_i32_6 = arith.constant 0 : i32
    %c0_i32_7 = arith.constant 0 : i32
    %c0_i32_8 = arith.constant 0 : i32
    %13 = tpu.memref_slice %arg2[%c0_i32_5, %c0_i32_6, %c0_i32_7, %c0_i32_8] : memref<2x18x18x128xf32, #tpu.memory_space<any>> -> memref<1x10x18x128xf32, #tpu.memory_space<any>>
    %14 = tpu.memref_squeeze %13 : memref<1x10x18x128xf32, #tpu.memory_space<any>> -> memref<10x18x128xf32, #tpu.memory_space<any>>
    %c0_i32_9 = arith.constant 0 : i32
    %c0_i32_10 = arith.constant 0 : i32
    %c0_i32_11 = arith.constant 0 : i32
    %15 = tpu.memref_slice %arg10[%9, %c0_i32_9, %c0_i32_10, %c0_i32_11] : memref<2x10x18x128xf32, #tpu.memory_space<vmem>> -> memref<1x10x18x128xf32, #tpu.memory_space<vmem>>
    %16 = tpu.memref_squeeze %15 : memref<1x10x18x128xf32, #tpu.memory_space<vmem>> -> memref<10x18x128xf32, #tpu.memory_space<vmem>>
    %17 = tpu.memref_slice %arg11[%9] : memref<2x!tpu.dma_semaphore, #tpu.memory_space<semaphore_mem>> -> memref<1x!tpu.dma_semaphore, #tpu.memory_space<semaphore_mem>>
    %18 = tpu.memref_squeeze %17 : memref<1x!tpu.dma_semaphore, #tpu.memory_space<semaphore_mem>> -> memref<!tpu.dma_semaphore, #tpu.memory_space<semaphore_mem>>
    tpu.wait_dma2 semaphore(%18 : memref<!tpu.dma_semaphore, #tpu.memory_space<semaphore_mem>>) src(%14 : memref<10x18x128xf32, #tpu.memory_space<any>>) dst(%16 : memref<10x18x128xf32, #tpu.memory_space<vmem>>)
    %c1_i32_12 = arith.constant 1 : i32
    %19 = arith.addi %arg1, %c1_i32_12 : i32
    %c2_i32_13 = arith.constant 2 : i32
    %20 = arith.cmpi slt, %19, %c2_i32_13 : i32
    %21 = arith.extui %20 : i1 to i32
    %c0_i32_14 = arith.constant 0 : i32
    %22 = arith.cmpi ne, %21, %c0_i32_14 : i32
    scf.if %22 {
      %c1_i32_37 = arith.constant 1 : i32
      %126 = arith.addi %arg1, %c1_i32_37 : i32
      %c1_i32_38 = arith.constant 1 : i32
      %127 = arith.subi %c1_i32_38, %9 : i32
      %c8_i32 = arith.constant 8 : i32
      %128 = arith.muli %126, %c8_i32 : i32
      %c1_i32_39 = arith.constant 1 : i32
      %129 = arith.muli %128, %c1_i32_39 : i32
      %c0_i32_40 = arith.constant 0 : i32
      %c0_i32_41 = arith.constant 0 : i32
      %130 = tpu.memref_slice %arg2[%arg0, %129, %c0_i32_40, %c0_i32_41] : memref<2x18x18x128xf32, #tpu.memory_space<any>> -> memref<1x10x18x128xf32, #tpu.memory_space<any>>
      %131 = tpu.memref_squeeze %130 : memref<1x10x18x128xf32, #tpu.memory_space<any>> -> memref<10x18x128xf32, #tpu.memory_space<any>>
      %c0_i32_42 = arith.constant 0 : i32
      %c0_i32_43 = arith.constant 0 : i32
      %c0_i32_44 = arith.constant 0 : i32
      %132 = tpu.memref_slice %arg10[%127, %c0_i32_42, %c0_i32_43, %c0_i32_44] : memref<2x10x18x128xf32, #tpu.memory_space<vmem>> -> memref<1x10x18x128xf32, #tpu.memory_space<vmem>>
      %133 = tpu.memref_squeeze %132 : memref<1x10x18x128xf32, #tpu.memory_space<vmem>> -> memref<10x18x128xf32, #tpu.memory_space<vmem>>
      %134 = tpu.memref_slice %arg11[%127] : memref<2x!tpu.dma_semaphore, #tpu.memory_space<semaphore_mem>> -> memref<1x!tpu.dma_semaphore, #tpu.memory_space<semaphore_mem>>
      %135 = tpu.memref_squeeze %134 : memref<1x!tpu.dma_semaphore, #tpu.memory_space<semaphore_mem>> -> memref<!tpu.dma_semaphore, #tpu.memory_space<semaphore_mem>>
      tpu.enqueue_dma source(%131 : memref<10x18x128xf32, #tpu.memory_space<any>>) target(%133 : memref<10x18x128xf32, #tpu.memory_space<vmem>>) target_semaphore(%135 : memref<!tpu.dma_semaphore, #tpu.memory_space<semaphore_mem>>)
    } else {
    }
    %23 = arith.index_cast %9 : i32 to index
    %c0 = arith.constant 0 : index
    %c0_15 = arith.constant 0 : index
    %c0_16 = arith.constant 0 : index
    %24 = vector.load %arg10[%23, %c0, %c0_15, %c0_16] : memref<2x10x18x128xf32, #tpu.memory_space<vmem>>, vector<1x10x18x128xf32>
    %25 = vector.shape_cast %24 : vector<1x10x18x128xf32> to vector<10x18x128xf32>
    %c0_17 = arith.constant 0 : index
    %c0_18 = arith.constant 0 : index
    %c0_19 = arith.constant 0 : index
    %26 = vector.load %arg3[%c0_17, %c0_18, %c0_19] : memref<3x3x128xf32, #tpu.memory_space<vmem>>, vector<3x3x128xf32>
    %cst = arith.constant 0.000000e+00 : f32
    %27 = vector.broadcast %cst : f32 to vector<8x16x128xf32>
    %28 = vector.extract_strided_slice %25 {offsets = [0, 0, 0], sizes = [8, 18, 128], strides = [1, 1, 1]} : vector<10x18x128xf32> to vector<8x18x128xf32>
    %29 = vector.extract_strided_slice %28 {offsets = [0, 0, 0], sizes = [8, 16, 128], strides = [1, 1, 1]} : vector<8x18x128xf32> to vector<8x16x128xf32>
    %30 = vector.extract_strided_slice %26 {offsets = [0, 0, 0], sizes = [1, 1, 128], strides = [1, 1, 1]} : vector<3x3x128xf32> to vector<1x1x128xf32>
    %31 = vector.shape_cast %30 : vector<1x1x128xf32> to vector<128xf32>
    %32 = vector.shape_cast %31 : vector<128xf32> to vector<1x1x128xf32>
    %33 = vector.broadcast %32 : vector<1x1x128xf32> to vector<8x16x128xf32>
    %34 = arith.mulf %29, %33 : vector<8x16x128xf32>
    %35 = arith.addf %27, %34 : vector<8x16x128xf32>
    %36 = vector.extract_strided_slice %28 {offsets = [0, 1, 0], sizes = [8, 16, 128], strides = [1, 1, 1]} : vector<8x18x128xf32> to vector<8x16x128xf32>
    %37 = vector.extract_strided_slice %26 {offsets = [0, 1, 0], sizes = [1, 1, 128], strides = [1, 1, 1]} : vector<3x3x128xf32> to vector<1x1x128xf32>
    %38 = vector.shape_cast %37 : vector<1x1x128xf32> to vector<128xf32>
    %39 = vector.shape_cast %38 : vector<128xf32> to vector<1x1x128xf32>
    %40 = vector.broadcast %39 : vector<1x1x128xf32> to vector<8x16x128xf32>
    %41 = arith.mulf %36, %40 : vector<8x16x128xf32>
    %42 = arith.addf %35, %41 : vector<8x16x128xf32>
    %43 = vector.extract_strided_slice %28 {offsets = [0, 2, 0], sizes = [8, 16, 128], strides = [1, 1, 1]} : vector<8x18x128xf32> to vector<8x16x128xf32>
    %44 = vector.extract_strided_slice %26 {offsets = [0, 2, 0], sizes = [1, 1, 128], strides = [1, 1, 1]} : vector<3x3x128xf32> to vector<1x1x128xf32>
    %45 = vector.shape_cast %44 : vector<1x1x128xf32> to vector<128xf32>
    %46 = vector.shape_cast %45 : vector<128xf32> to vector<1x1x128xf32>
    %47 = vector.broadcast %46 : vector<1x1x128xf32> to vector<8x16x128xf32>
    %48 = arith.mulf %43, %47 : vector<8x16x128xf32>
    %49 = arith.addf %42, %48 : vector<8x16x128xf32>
    %50 = vector.extract_strided_slice %25 {offsets = [1, 0, 0], sizes = [8, 18, 128], strides = [1, 1, 1]} : vector<10x18x128xf32> to vector<8x18x128xf32>
    %51 = vector.extract_strided_slice %50 {offsets = [0, 0, 0], sizes = [8, 16, 128], strides = [1, 1, 1]} : vector<8x18x128xf32> to vector<8x16x128xf32>
    %52 = vector.extract_strided_slice %26 {offsets = [1, 0, 0], sizes = [1, 1, 128], strides = [1, 1, 1]} : vector<3x3x128xf32> to vector<1x1x128xf32>
    %53 = vector.shape_cast %52 : vector<1x1x128xf32> to vector<128xf32>
    %54 = vector.shape_cast %53 : vector<128xf32> to vector<1x1x128xf32>
    %55 = vector.broadcast %54 : vector<1x1x128xf32> to vector<8x16x128xf32>
    %56 = arith.mulf %51, %55 : vector<8x16x128xf32>
    %57 = arith.addf %49, %56 : vector<8x16x128xf32>
    %58 = vector.extract_strided_slice %50 {offsets = [0, 1, 0], sizes = [8, 16, 128], strides = [1, 1, 1]} : vector<8x18x128xf32> to vector<8x16x128xf32>
    %59 = vector.extract_strided_slice %26 {offsets = [1, 1, 0], sizes = [1, 1, 128], strides = [1, 1, 1]} : vector<3x3x128xf32> to vector<1x1x128xf32>
    %60 = vector.shape_cast %59 : vector<1x1x128xf32> to vector<128xf32>
    %61 = vector.shape_cast %60 : vector<128xf32> to vector<1x1x128xf32>
    %62 = vector.broadcast %61 : vector<1x1x128xf32> to vector<8x16x128xf32>
    %63 = arith.mulf %58, %62 : vector<8x16x128xf32>
    %64 = arith.addf %57, %63 : vector<8x16x128xf32>
    %65 = vector.extract_strided_slice %50 {offsets = [0, 2, 0], sizes = [8, 16, 128], strides = [1, 1, 1]} : vector<8x18x128xf32> to vector<8x16x128xf32>
    %66 = vector.extract_strided_slice %26 {offsets = [1, 2, 0], sizes = [1, 1, 128], strides = [1, 1, 1]} : vector<3x3x128xf32> to vector<1x1x128xf32>
    %67 = vector.shape_cast %66 : vector<1x1x128xf32> to vector<128xf32>
    %68 = vector.shape_cast %67 : vector<128xf32> to vector<1x1x128xf32>
    %69 = vector.broadcast %68 : vector<1x1x128xf32> to vector<8x16x128xf32>
    %70 = arith.mulf %65, %69 : vector<8x16x128xf32>
    %71 = arith.addf %64, %70 : vector<8x16x128xf32>
    %72 = vector.extract_strided_slice %25 {offsets = [2, 0, 0], sizes = [8, 18, 128], strides = [1, 1, 1]} : vector<10x18x128xf32> to vector<8x18x128xf32>
    %73 = vector.extract_strided_slice %72 {offsets = [0, 0, 0], sizes = [8, 16, 128], strides = [1, 1, 1]} : vector<8x18x128xf32> to vector<8x16x128xf32>
    %74 = vector.extract_strided_slice %26 {offsets = [2, 0, 0], sizes = [1, 1, 128], strides = [1, 1, 1]} : vector<3x3x128xf32> to vector<1x1x128xf32>
    %75 = vector.shape_cast %74 : vector<1x1x128xf32> to vector<128xf32>
    %76 = vector.shape_cast %75 : vector<128xf32> to vector<1x1x128xf32>
    %77 = vector.broadcast %76 : vector<1x1x128xf32> to vector<8x16x128xf32>
    %78 = arith.mulf %73, %77 : vector<8x16x128xf32>
    %79 = arith.addf %71, %78 : vector<8x16x128xf32>
    %80 = vector.extract_strided_slice %72 {offsets = [0, 1, 0], sizes = [8, 16, 128], strides = [1, 1, 1]} : vector<8x18x128xf32> to vector<8x16x128xf32>
    %81 = vector.extract_strided_slice %26 {offsets = [2, 1, 0], sizes = [1, 1, 128], strides = [1, 1, 1]} : vector<3x3x128xf32> to vector<1x1x128xf32>
    %82 = vector.shape_cast %81 : vector<1x1x128xf32> to vector<128xf32>
    %83 = vector.shape_cast %82 : vector<128xf32> to vector<1x1x128xf32>
    %84 = vector.broadcast %83 : vector<1x1x128xf32> to vector<8x16x128xf32>
    %85 = arith.mulf %80, %84 : vector<8x16x128xf32>
    %86 = arith.addf %79, %85 : vector<8x16x128xf32>
    %87 = vector.extract_strided_slice %72 {offsets = [0, 2, 0], sizes = [8, 16, 128], strides = [1, 1, 1]} : vector<8x18x128xf32> to vector<8x16x128xf32>
    %88 = vector.extract_strided_slice %26 {offsets = [2, 2, 0], sizes = [1, 1, 128], strides = [1, 1, 1]} : vector<3x3x128xf32> to vector<1x1x128xf32>
    %89 = vector.shape_cast %88 : vector<1x1x128xf32> to vector<128xf32>
    %90 = vector.shape_cast %89 : vector<128xf32> to vector<1x1x128xf32>
    %91 = vector.broadcast %90 : vector<1x1x128xf32> to vector<8x16x128xf32>
    %92 = arith.mulf %87, %91 : vector<8x16x128xf32>
    %93 = arith.addf %86, %92 : vector<8x16x128xf32>
    %c0_20 = arith.constant 0 : index
    %c0_21 = arith.constant 0 : index
    %94 = vector.load %arg4[%c0_20, %c0_21] : memref<1x128xf32, #tpu.memory_space<vmem>>, vector<1x128xf32>
    %95 = vector.shape_cast %94 : vector<1x128xf32> to vector<128xf32>
    %96 = vector.shape_cast %95 : vector<128xf32> to vector<1x1x128xf32>
    %97 = vector.broadcast %96 : vector<1x1x128xf32> to vector<8x16x128xf32>
    %98 = arith.mulf %93, %97 : vector<8x16x128xf32>
    %c0_22 = arith.constant 0 : index
    %c0_23 = arith.constant 0 : index
    %99 = vector.load %arg5[%c0_22, %c0_23] : memref<1x128xf32, #tpu.memory_space<vmem>>, vector<1x128xf32>
    %100 = vector.shape_cast %99 : vector<1x128xf32> to vector<128xf32>
    %101 = vector.shape_cast %100 : vector<128xf32> to vector<1x1x128xf32>
    %102 = vector.broadcast %101 : vector<1x1x128xf32> to vector<8x16x128xf32>
    %103 = arith.addf %98, %102 : vector<8x16x128xf32>
    %cst_24 = arith.constant 0.000000e+00 : f32
    %104 = vector.broadcast %cst_24 : f32 to vector<8x16x128xf32>
    %105 = arith.maximumf %103, %104 : vector<8x16x128xf32>
    %106 = vector.shape_cast %105 : vector<8x16x128xf32> to vector<128x128xf32>
    %107 = arith.truncf %106 : vector<128x128xf32> to vector<128x128xbf16>
    %c0_25 = arith.constant 0 : index
    %c0_26 = arith.constant 0 : index
    %108 = vector.load %arg6[%c0_25, %c0_26] : memref<128x128xbf16, #tpu.memory_space<vmem>>, vector<128x128xbf16>
    %cst_27 = arith.constant dense<0.000000e+00> : vector<128x128xf32>
    %109 = tpu.matmul %107, %108, %cst_27 {dimension_numbers = #tpu.dot_dimension_numbers<[1], [0], [0], [1], [0, 0, 1, 1], [], []>} : vector<128x128xbf16>, vector<128x128xbf16>, vector<128x128xf32> -> vector<128x128xf32>
    %c0_28 = arith.constant 0 : index
    %c0_29 = arith.constant 0 : index
    %110 = vector.load %arg7[%c0_28, %c0_29] : memref<1x128xf32, #tpu.memory_space<vmem>>, vector<1x128xf32>
    %111 = vector.shape_cast %110 : vector<1x128xf32> to vector<128xf32>
    %112 = vector.shape_cast %111 : vector<128xf32> to vector<1x128xf32>
    %113 = vector.broadcast %112 : vector<1x128xf32> to vector<128x128xf32>
    %114 = arith.mulf %109, %113 : vector<128x128xf32>
    %c0_30 = arith.constant 0 : index
    %c0_31 = arith.constant 0 : index
    %115 = vector.load %arg8[%c0_30, %c0_31] : memref<1x128xf32, #tpu.memory_space<vmem>>, vector<1x128xf32>
    %116 = vector.shape_cast %115 : vector<1x128xf32> to vector<128xf32>
    %117 = vector.shape_cast %116 : vector<128xf32> to vector<1x128xf32>
    %118 = vector.broadcast %117 : vector<1x128xf32> to vector<128x128xf32>
    %119 = arith.addf %114, %118 : vector<128x128xf32>
    %cst_32 = arith.constant 0.000000e+00 : f32
    %120 = vector.broadcast %cst_32 : f32 to vector<128x128xf32>
    %121 = arith.maximumf %119, %120 : vector<128x128xf32>
    %122 = vector.shape_cast %121 : vector<128x128xf32> to vector<8x16x128xf32>
    %c0_33 = arith.constant 0 : index
    %c0_34 = arith.constant 0 : index
    %c0_35 = arith.constant 0 : index
    %c0_36 = arith.constant 0 : index
    %123 = vector.load %arg9[%c0_33, %c0_34, %c0_35, %c0_36] : memref<1x8x16x128xf32, #tpu.memory_space<vmem>>, vector<1x8x16x128xf32>
    %124 = vector.shape_cast %123 : vector<1x8x16x128xf32> to vector<8x16x128xf32>
    %125 = vector.shape_cast %122 : vector<8x16x128xf32> to vector<1x8x16x128xf32>
    tpu.vector_store %arg9[%c0_33, %c0_34, %c0_35, %c0_36], %125 {strides = array<i32>} : memref<1x8x16x128xf32, #tpu.memory_space<vmem>>, vector<1x8x16x128xf32>,
    return
  }
  func.func @transform_1(%arg0: i32, %arg1: i32) -> (i32, i32, i32) {
    %c0_i32 = arith.constant 0 : i32
    %c0_i32_0 = arith.constant 0 : i32
    %c0_i32_1 = arith.constant 0 : i32
    %c0_i32_2 = arith.constant 0 : i32
    return %c0_i32, %c0_i32_0, %c0_i32_1 : i32, i32, i32
  }
  func.func @transform_2(%arg0: i32, %arg1: i32) -> (i32, i32) {
    %c0_i32 = arith.constant 0 : i32
    %c0_i32_0 = arith.constant 0 : i32
    %c0_i32_1 = arith.constant 0 : i32
    return %c0_i32, %c0_i32_0 : i32, i32
  }
  func.func @transform_3(%arg0: i32, %arg1: i32) -> (i32, i32) {
    %c0_i32 = arith.constant 0 : i32
    %c0_i32_0 = arith.constant 0 : i32
    %c0_i32_1 = arith.constant 0 : i32
    return %c0_i32, %c0_i32_0 : i32, i32
  }
  func.func @transform_4(%arg0: i32, %arg1: i32) -> (i32, i32) {
    %c0_i32 = arith.constant 0 : i32
    %c0_i32_0 = arith.constant 0 : i32
    %c0_i32_1 = arith.constant 0 : i32
    return %c0_i32, %c0_i32_0 : i32, i32
  }
  func.func @transform_5(%arg0: i32, %arg1: i32) -> (i32, i32) {
    %c0_i32 = arith.constant 0 : i32
    %c0_i32_0 = arith.constant 0 : i32
    %c0_i32_1 = arith.constant 0 : i32
    return %c0_i32, %c0_i32_0 : i32, i32
  }
  func.func @transform_6(%arg0: i32, %arg1: i32) -> (i32, i32) {
    %c0_i32 = arith.constant 0 : i32
    %c0_i32_0 = arith.constant 0 : i32
    %c0_i32_1 = arith.constant 0 : i32
    return %c0_i32, %c0_i32_0 : i32, i32
  }
  func.func @transform_7(%arg0: i32, %arg1: i32) -> (i32, i32, i32, i32) {
    %c0_i32 = arith.constant 0 : i32
    %c0_i32_0 = arith.constant 0 : i32
    %c0_i32_1 = arith.constant 0 : i32
    return %arg0, %arg1, %c0_i32, %c0_i32_0 : i32, i32, i32, i32
  }
}

</mosaic_0001>

<llo_original>
// kernel: tpu_custom_call.1
$region0: #{tpu_custom_call.1}
  #allocation0 [shape = 'u32[]', space=smem, size = 0x4, offset = 0x4, fixed_abs, tag = 'smem constant byte address 0x4 - core index']
  #allocation1 [shape = 'u32[144,128]{1,0:T(1,128)}', space=vmem, size = 0x12000, scoped, tag = 'internal scratch']
  #allocation2 [shape = 'f32[2,10,18,128]{3,2,1,0:T(8,128)}', space=vmem, size = 0x3c000, scoped, tag = 'scratch operand']
  #allocation3 [shape = 's32[2]{0}', space=sflag, size = 0x8, scoped, tag = 'scratch operand']
  #allocation6 [shape = 's32[]', space=sflag, size = 0x4, offset = 0, fixed_abs, tag = 'sflag constant byte address 0x0 - dummy sync flag']
  #allocation7 [shape = 's32[]', space=sflag, size = 0x4, offset = 0, fixed_abs, tag = 'sflag constant byte address 0x0 - dummy sync flag']
  %s0 = inlined_call_operand.vmem [shape: f32[2,18,18,128], index: 0, kind: input, shape index: {}]
  %s1 = inlined_call_operand.vmem [shape: f32[3,3,128], index: 1, kind: input, shape index: {}]
  %s2 = inlined_call_operand.vmem [shape: f32[1,128], index: 2, kind: input, shape index: {}]
  %s3 = inlined_call_operand.vmem [shape: f32[1,128], index: 3, kind: input, shape index: {}]
  %s4 = inlined_call_operand.vmem [shape: bf16[128,128], index: 4, kind: input, shape index: {}]
  %s5 = inlined_call_operand.vmem [shape: f32[1,128], index: 5, kind: input, shape index: {}]
  %s6 = inlined_call_operand.vmem [shape: f32[1,128], index: 6, kind: input, shape index: {}]
  %s7 = inlined_call_operand.hbm [shape: f32[2,16,16,128], index: 7, kind: output, shape index: {}]
  %s8 = sld [smem:[#allocation0]]
  $region139: #{tpu_custom_call.1} parent=0
    _
  %s10 = ssub.s32 1, %s8
  %s11 = scalar_select 0, %s10, %s8
  $region1: #{tpu_custom_call.1} parent=0
    #allocation4 [shape = 'u8[131072]{0}', space=vmem, size = 0x20000, scoped, tag = 'output window, operand 0']
    #allocation5 [shape = 's32[2]{0}', space=sflag, size = 0x8, scoped, tag = 'scoped memory for tpu_custom_call.1']
    %12 = vsyncpa [#allocation5], 0
    %s13 = scalar_lea.sflag [#allocation5], 1
    %14 = vsyncpa %s13, 0
    loop: start=0, step=1, limit=6
    $region2: #{tpu_custom_call.1} parent=1 // loop_pre_header
      _
    $region3: #{tpu_custom_call.1} parent=1 // loop_header
      %s16 = sphi 0, %s20
      %p17 = scmp.ge.s32.totalorder %s16, 6
      %s23 = sphi 0, %s35
      %s24 = sphi 0, %s31
      %s25 = sphi 0, %s23
      %s26 = sphi 0, %s24
      %s27 = sphi 0, %s25
      %s28 = sphi 0, %s26
      %s36 = sphi 0, %s36
      %s38 = sphi 0, %s36
      %s39 = sphi 0, %s38
      %s53 = sphi 0, %s39
      %s57 = sphi 0, %s57
      %s59 = sphi 0, %s57
      %s60 = sphi 0, %s59
      %s74 = sphi 0, %s60
      %s78 = sphi 0, %s78
      %s80 = sphi 0, %s78
      %s81 = sphi 0, %s80
      %s95 = sphi 0, %s81
      %s99 = sphi 0, %s99
      %s101 = sphi 0, %s99
      %s102 = sphi 0, %s101
      %s116 = sphi 0, %s102
      %s120 = sphi 0, %s120
      %s122 = sphi 0, %s120
      %s123 = sphi 0, %s122
      %s137 = sphi 0, %s123
      %s141 = sphi 0, %s141
      %s143 = sphi 0, %s141
      %s144 = sphi 0, %s143
      %s158 = sphi 0, %s144
      %s166 = sphi 0, %s168
      %s169 = sphi 0, %s166
      %s170 = sphi 0, %s169
      %s186 = sphi 0, %s170
    $region4: #{tpu_custom_call.1} parent=1 // loop_header_branch
      %19 = sbr.rel (%p17) target = $region8
    $region5: #{tpu_custom_call.1} parent=1 // loop_body
      %s21 = ssub.s32 %s16, 1
      %s22 = ssub.s32 %s16, 2
      %s29 = sadd.s32 1, %s24
      %p30 = scmp.ge.s32.totalorder %s29, 2
      %s31 = scalar_select %p30, 0, %s29
      %s32 = sadd.s32 1, %s23
      %s33 = scalar_select %p30, %s32, %s23
      %p34 = scmp.ge.s32.totalorder %s33, 2
      %s35 = scalar_select %p34, 0, %s33
      %s37 = sadd.s32 %s36, 1
      %p40 = scmp.eq.s32.totalorder %s16, 3
      %p41 = scmp.ne.s32.totalorder %s36, %s38
      %p42 = scmp.eq.s32.totalorder %s16, 0
      %p43 = por %p41, %p42
      %p44 = scmp.ne.s32.totalorder %s36, %s38
      %p45 = scmp.eq.s32.totalorder %s21, 3
      %p46 = por %p44, %p45
      %p47 = scmp.ne.s32.totalorder %s38, %s39
      %p48 = scmp.eq.s32.totalorder %s21, 0
      %p49 = por %p47, %p48
      %p50 = scmp.ne.s32.totalorder %s38, %s39
      %p51 = scmp.eq.s32.totalorder %s22, 3
      %p52 = por %p50, %p51
      %p54 = scmp.ne.s32.totalorder %s39, %s53
      %p55 = scmp.eq.s32.totalorder %s22, 0
      %p56 = por %p54, %p55
      %s58 = sadd.s32 %s57, 1
      %p61 = scmp.eq.s32.totalorder %s16, 3
      %p62 = scmp.ne.s32.totalorder %s57, %s59
      %p63 = scmp.eq.s32.totalorder %s16, 0
      %p64 = por %p62, %p63
      %p65 = scmp.ne.s32.totalorder %s57, %s59
      %p66 = scmp.eq.s32.totalorder %s21, 3
      %p67 = por %p65, %p66
      %p68 = scmp.ne.s32.totalorder %s59, %s60
      %p69 = scmp.eq.s32.totalorder %s21, 0
      %p70 = por %p68, %p69
      %p71 = scmp.ne.s32.totalorder %s59, %s60
      %p72 = scmp.eq.s32.totalorder %s22, 3
      %p73 = por %p71, %p72
      %p75 = scmp.ne.s32.totalorder %s60, %s74
      %p76 = scmp.eq.s32.totalorder %s22, 0
      %p77 = por %p75, %p76
      %s79 = sadd.s32 %s78, 1
      %p82 = scmp.eq.s32.totalorder %s16, 3
      %p83 = scmp.ne.s32.totalorder %s78, %s80
      %p84 = scmp.eq.s32.totalorder %s16, 0
      %p85 = por %p83, %p84
      %p86 = scmp.ne.s32.totalorder %s78, %s80
      %p87 = scmp.eq.s32.totalorder %s21, 3
      %p88 = por %p86, %p87
      %p89 = scmp.ne.s32.totalorder %s80, %s81
      %p90 = scmp.eq.s32.totalorder %s21, 0
      %p91 = por %p89, %p90
      %p92 = scmp.ne.s32.totalorder %s80, %s81
      %p93 = scmp.eq.s32.totalorder %s22, 3
      %p94 = por %p92, %p93
      %p96 = scmp.ne.s32.totalorder %s81, %s95
      %p97 = scmp.eq.s32.totalorder %s22, 0
      %p98 = por %p96, %p97
      %s100 = sadd.s32 %s99, 1
      %p103 = scmp.eq.s32.totalorder %s16, 3
      %p104 = scmp.ne.s32.totalorder %s99, %s101
      %p105 = scmp.eq.s32.totalorder %s16, 0
      %p106 = por %p104, %p105
      %p107 = scmp.ne.s32.totalorder %s99, %s101
      %p108 = scmp.eq.s32.totalorder %s21, 3
      %p109 = por %p107, %p108
      %p110 = scmp.ne.s32.totalorder %s101, %s102
      %p111 = scmp.eq.s32.totalorder %s21, 0
      %p112 = por %p110, %p111
      %p113 = scmp.ne.s32.totalorder %s101, %s102
      %p114 = scmp.eq.s32.totalorder %s22, 3
      %p115 = por %p113, %p114
      %p117 = scmp.ne.s32.totalorder %s102, %s116
      %p118 = scmp.eq.s32.totalorder %s22, 0
      %p119 = por %p117, %p118
      %s121 = sadd.s32 %s120, 1
      %p124 = scmp.eq.s32.totalorder %s16, 3
      %p125 = scmp.ne.s32.totalorder %s120, %s122
      %p126 = scmp.eq.s32.totalorder %s16, 0
      %p127 = por %p125, %p126
      %p128 = scmp.ne.s32.totalorder %s120, %s122
      %p129 = scmp.eq.s32.totalorder %s21, 3
      %p130 = por %p128, %p129
      %p131 = scmp.ne.s32.totalorder %s122, %s123
      %p132 = scmp.eq.s32.totalorder %s21, 0
      %p133 = por %p131, %p132
      %p134 = scmp.ne.s32.totalorder %s122, %s123
      %p135 = scmp.eq.s32.totalorder %s22, 3
      %p136 = por %p134, %p135
      %p138 = scmp.ne.s32.totalorder %s123, %s137
      %p139 = scmp.eq.s32.totalorder %s22, 0
      %p140 = por %p138, %p139
      %s142 = sadd.s32 %s141, 1
      %p145 = scmp.eq.s32.totalorder %s16, 3
      %p146 = scmp.ne.s32.totalorder %s141, %s143
      %p147 = scmp.eq.s32.totalorder %s16, 0
      %p148 = por %p146, %p147
      %p149 = scmp.ne.s32.totalorder %s141, %s143
      %p150 = scmp.eq.s32.totalorder %s21, 3
      %p151 = por %p149, %p150
      %p152 = scmp.ne.s32.totalorder %s143, %s144
      %p153 = scmp.eq.s32.totalorder %s21, 0
      %p154 = por %p152, %p153
      %p155 = scmp.ne.s32.totalorder %s143, %s144
      %p156 = scmp.eq.s32.totalorder %s22, 3
      %p157 = por %p155, %p156
      %p159 = scmp.ne.s32.totalorder %s144, %s158
      %p160 = scmp.eq.s32.totalorder %s22, 0
      %p161 = por %p159, %p160
      %s162 = ssub.s32 %s23, %s35
      %s163 = ssub.s32 %s24, %s31
      %s164 = sor.u32 %s162, %s163
      %p165 = scmp.eq.s32.totalorder %s164, 0
      %s167 = sadd.s32 %s166, 1
      %s168 = scalar_select %p165, %s166, %s167
      %p171 = pneg %p165
      %p172 = scmp.eq.s32.totalorder %s16, 3
      %p173 = por %p171, %p172
      %p174 = scmp.ne.s32.totalorder %s166, %s169
      %p175 = scmp.eq.s32.totalorder %s16, 0
      %p176 = por %p174, %p175
      %p177 = scmp.ne.s32.totalorder %s166, %s169
      %p178 = scmp.eq.s32.totalorder %s21, 3
      %p179 = por %p177, %p178
      %p180 = scmp.ne.s32.totalorder %s169, %s170
      %p181 = scmp.eq.s32.totalorder %s21, 0
      %p182 = por %p180, %p181
      %p183 = scmp.ne.s32.totalorder %s169, %s170
      %p184 = scmp.eq.s32.totalorder %s22, 3
      %p185 = por %p183, %p184
      %p187 = scmp.ne.s32.totalorder %s170, %s186
      %p188 = scmp.eq.s32.totalorder %s22, 0
      %p189 = por %p187, %p188
      %p190 = scmp.le.s32.totalorder 1, %s16
      %p191 = scmp.lt.s32.totalorder %s16, 5
      %p192 = pnand %p190, %p191
      %p193 = pneg %p192
      // Predicated region
      $region9: #{tpu_custom_call.1} parent=5 // pred_check
        _
      $region10: #{tpu_custom_call.1} parent=5 // pred_check_branch
        %195 = sbr.rel (%p192) target = $region12
      $region11: #{tpu_custom_call.1} parent=5 // pred_region
        %s196 = ssub.s32 %s16, 1
        // Predicated region
        $region13: #{tpu_custom_call.1} parent=11 // pred_check
          %p197 = pneg %p49
        $region14: #{tpu_custom_call.1} parent=11 // pred_check_branch
          %199 = sbr.rel (%p197) target = $region16
        $region15: #{tpu_custom_call.1} parent=11 // pred_region
          _
        $region16: #{tpu_custom_call.1} parent=11 // pred_fallthru
          _
        // Predicated region
        $region17: #{tpu_custom_call.1} parent=11 // pred_check
          %p200 = pneg %p70
        $region18: #{tpu_custom_call.1} parent=11 // pred_check_branch
          %202 = sbr.rel (%p200) target = $region20
        $region19: #{tpu_custom_call.1} parent=11 // pred_region
          _
        $region20: #{tpu_custom_call.1} parent=11 // pred_fallthru
          _
        // Predicated region
        $region21: #{tpu_custom_call.1} parent=11 // pred_check
          %p203 = pneg %p91
        $region22: #{tpu_custom_call.1} parent=11 // pred_check_branch
          %205 = sbr.rel (%p203) target = $region24
        $region23: #{tpu_custom_call.1} parent=11 // pred_region
          _
        $region24: #{tpu_custom_call.1} parent=11 // pred_fallthru
          _
        // Predicated region
        $region25: #{tpu_custom_call.1} parent=11 // pred_check
          %p206 = pneg %p112
        $region26: #{tpu_custom_call.1} parent=11 // pred_check_branch
          %208 = sbr.rel (%p206) target = $region28
        $region27: #{tpu_custom_call.1} parent=11 // pred_region
          _
        $region28: #{tpu_custom_call.1} parent=11 // pred_fallthru
          _
        // Predicated region
        $region29: #{tpu_custom_call.1} parent=11 // pred_check
          %p209 = pneg %p133
        $region30: #{tpu_custom_call.1} parent=11 // pred_check_branch
          %211 = sbr.rel (%p209) target = $region32
        $region31: #{tpu_custom_call.1} parent=11 // pred_region
          _
        $region32: #{tpu_custom_call.1} parent=11 // pred_fallthru
          _
        // Predicated region
        $region33: #{tpu_custom_call.1} parent=11 // pred_check
          %p212 = pneg %p154
        $region34: #{tpu_custom_call.1} parent=11 // pred_check_branch
          %214 = sbr.rel (%p212) target = $region36
        $region35: #{tpu_custom_call.1} parent=11 // pred_region
          _
        $region36: #{tpu_custom_call.1} parent=11 // pred_fallthru
          _
      $region12: #{tpu_custom_call.1} parent=5 // pred_fallthru
        _
      %p215 = scmp.lt.s32.totalorder %s16, 4
      // Predicated region
      $region37: #{tpu_custom_call.1} parent=5 // pred_check
        %p216 = pneg %p215
      $region38: #{tpu_custom_call.1} parent=5 // pred_check_branch
        %218 = sbr.rel (%p216) target = $region40
      $region39: #{tpu_custom_call.1} parent=5 // pred_region
        _
      $region40: #{tpu_custom_call.1} parent=5 // pred_fallthru
        _
      %p219 = scmp.le.s32.totalorder 1, %s16
      %p220 = scmp.lt.s32.totalorder %s16, 5
      %p221 = pnand %p219, %p220
      %p222 = pneg %p221
      // Predicated region
      $region41: #{tpu_custom_call.1} parent=5 // pred_check
        _
      $region42: #{tpu_custom_call.1} parent=5 // pred_check_branch
        %224 = sbr.rel (%p221) target = $region44
      $region43: #{tpu_custom_call.1} parent=5 // pred_region
        %s225 = ssub.s32 %s16, 1
        %p226 = pneg %p49
        %p227 = pneg %p46
        %p228 = pneg %p70
        %p229 = pneg %p67
        %p230 = pneg %p91
        %p231 = pneg %p88
        %p232 = pneg %p112
        %p233 = pneg %p109
        %p234 = pneg %p133
        %p235 = pneg %p130
        %p236 = pneg %p154
        %p237 = pneg %p151
        %p238 = pneg %p182
        %p239 = pneg %p179
        %s240 = sand.u32 %s169, 1
        %s241 = scalar_lea.sflag [#allocation5], %s240
        %s242 = sand.u32 %s169, 1
        %s243 = smul.addr %s242, 128
        %s244 = scalar_lea.vmem [#allocation4], %s243
        %s245 = smul.u32 8, %s26
        %p247 = scmp.lt.s32.totalorder %s26, 0
        %s248 = ssub.s32 0, %s26
        %s249 = scalar_select %p247, %s248, %s26
        %s250 = sand.u32 %s249, 1
        %s251 = ssub.s32 0, %s250
        %s252 = scalar_select %p247, %s251, %s250
        %p253 = scmp.ne.s32.totalorder %s252, 0
        %p254 = scmp.lt.s32.totalorder %s252, 0
        %p255 = pnand %p254, %p253
        %p256 = pneg %p255
        %s257 = sadd.s32 %s252, 2
        %s258 = scalar_select %p256, %s257, %s252
        %p259 = scmp.eq.s32.totalorder %s26, 0
        // Predicated region
        $region45: #{tpu_custom_call.1} parent=43 // pred_check
          %p260 = pneg %p259
        $region46: #{tpu_custom_call.1} parent=43 // pred_check_branch
          %262 = sbr.rel (%p260) target = $region48
        $region47: #{tpu_custom_call.1} parent=43 // pred_region
          %s263 = smul.u32 %s25, 432
          %s264 = scalar_lea.vmem %s0, %s263
          %p266 = scmp.lt.u32.totalorder 18, 8
          %p267 = pneg %p266
          // Predicated region
          $region49: #{tpu_custom_call.1} parent=47 // pred_check
            _
          $region50: #{tpu_custom_call.1} parent=47 // pred_check_branch
            %269 = sbr.rel (%p266) target = $region52
          $region51: #{tpu_custom_call.1} parent=47 // pred_region
            %s303 = sand.u32 18, 7
            %p304 = scmp.eq.s32.totalorder %s303, 0
            %p305 = pneg %p304
            // Predicated region
            $region64: #{tpu_custom_call.1} parent=51 // pred_check
              _
            $region65: #{tpu_custom_call.1} parent=51 // pred_check_branch
              %307 = sbr.rel (%p304) target = $region67
            $region66: #{tpu_custom_call.1} parent=51 // pred_region
              %s308 = sand.u32 18, 7
              %s309 = ssub.s32 18, %s308
              %s310 = scalar_lea.vmem %s264, %s309
              %s311 = ssub.s32 18, %s308
              %s312 = scalar_lea.vmem [#allocation2], %s311
              loop: start=0, step=1, limit=1
              $region68: #{tpu_custom_call.1} parent=66 // loop_pre_header
                _
              $region69: #{tpu_custom_call.1} parent=66 // loop_header
                %s314 = sphi 0, %s318
                %p315 = scmp.ge.s32.totalorder %s314, 1
                %s319 = sphi %s264, %s264
                %s320 = sphi [#allocation2], [#allocation2]
              $region70: #{tpu_custom_call.1} parent=66 // loop_header_branch
                %317 = sbr.rel (%p315) target = $region74
              $region71: #{tpu_custom_call.1} parent=66 // loop_body
                %v321 = vld [vmem:[%s319] sm:$0xff]
                %322 = vst [vmem:[%s320] sm:$0xff] %v321
                %v323 = vld [vmem:[%s319 + $0x8] sm:$0xff]
                %324 = vst [vmem:[%s320 + $0x8] sm:$0xff] %v323
                %v325 = vld [vmem:[%s319 + $0x18] sm:$0xff]
                %326 = vst [vmem:[%s320 + $0x18] sm:$0xff] %v325
                %v327 = vld [vmem:[%s319 + $0x20] sm:$0xff]
                %328 = vst [vmem:[%s320 + $0x20] sm:$0xff] %v327
                %v329 = vld [vmem:[%s319 + $0x30] sm:$0xff]
                %330 = vst [vmem:[%s320 + $0x30] sm:$0xff] %v329
                %v331 = vld [vmem:[%s319 + $0x38] sm:$0xff]
                %332 = vst [vmem:[%s320 + $0x38] sm:$0xff] %v331
                %v333 = vld [vmem:[%s319 + $0x48] sm:$0xff]
                %334 = vst [vmem:[%s320 + $0x48] sm:$0xff] %v333
                %v335 = vld [vmem:[%s319 + $0x50] sm:$0xff]
                %336 = vst [vmem:[%s320 + $0x50] sm:$0xff] %v335
                %v337 = vld [vmem:[%s319 + $0x60] sm:$0xff]
                %338 = vst [vmem:[%s320 + $0x60] sm:$0xff] %v337
                %v339 = vld [vmem:[%s319 + $0x68] sm:$0xff]
                %340 = vst [vmem:[%s320 + $0x68] sm:$0xff] %v339
                %v341 = vld [vmem:[%s319 + $0x78] sm:$0xff]
                %342 = vst [vmem:[%s320 + $0x78] sm:$0xff] %v341
                %v343 = vld [vmem:[%s319 + $0x80] sm:$0xff]
                %344 = vst [vmem:[%s320 + $0x80] sm:$0xff] %v343
                %v345 = vld [vmem:[%s319 + $0x90] sm:$0xff]
                %346 = vst [vmem:[%s320 + $0x90] sm:$0xff] %v345
                %v347 = vld [vmem:[%s319 + $0x98] sm:$0xff]
                %348 = vst [vmem:[%s320 + $0x98] sm:$0xff] %v347
                %v349 = vld [vmem:[%s319 + $0xa8] sm:$0xff]
                %350 = vst [vmem:[%s320 + $0xa8] sm:$0xff] %v349
                %v351 = vld [vmem:[%s319 + $0xb0] sm:$0xff]
                %352 = vst [vmem:[%s320 + $0xb0] sm:$0xff] %v351
                %v353 = vld [vmem:[%s319 + $0xc0] sm:$0xff]
                %354 = vst [vmem:[%s320 + $0xc0] sm:$0xff] %v353
                %v355 = vld [vmem:[%s319 + $0xc8] sm:$0xff]
                %356 = vst [vmem:[%s320 + $0xc8] sm:$0xff] %v355
                %v357 = vld [vmem:[%s319 + $0xd8] sm:$0xff]
                %358 = vst [vmem:[%s320 + $0xd8] sm:$0xff] %v357
                %v359 = vld [vmem:[%s319 + $0xe0] sm:$0xff]
                %360 = vst [vmem:[%s320 + $0xe0] sm:$0xff] %v359
              $region72: #{tpu_custom_call.1} parent=66 // loop_footer
                %s318 = sadd.s32 1, %s314
              $region73: #{tpu_custom_call.1} parent=66 // loop_footer_branch
                %313 = sbr.rel target = $region69
              $region74: #{tpu_custom_call.1} parent=66 // loop_exit
                _
              %s361 = sshll.u32 1, %s308
              %s362 = ssub.s32 %s361, 1
              loop: start=0, step=1, limit=1
              $region75: #{tpu_custom_call.1} parent=66 // loop_pre_header
                _
              $region76: #{tpu_custom_call.1} parent=66 // loop_header
                %s364 = sphi 0, %s368
                %p365 = scmp.ge.s32.totalorder %s364, 1
                %s369 = sphi %s310, %s310
                %s370 = sphi %s312, %s312
              $region77: #{tpu_custom_call.1} parent=66 // loop_header_branch
                %367 = sbr.rel (%p365) target = $region81
              $region78: #{tpu_custom_call.1} parent=66 // loop_body
                %v371 = vld [vmem:[%s369] sm:%s362]
                %372 = vst [vmem:[%s370] sm:%s362] %v371
                %v373 = vld [vmem:[%s369 + $0x18] sm:%s362]
                %374 = vst [vmem:[%s370 + $0x18] sm:%s362] %v373
                %v375 = vld [vmem:[%s369 + $0x30] sm:%s362]
                %376 = vst [vmem:[%s370 + $0x30] sm:%s362] %v375
                %v377 = vld [vmem:[%s369 + $0x48] sm:%s362]
                %378 = vst [vmem:[%s370 + $0x48] sm:%s362] %v377
                %v379 = vld [vmem:[%s369 + $0x60] sm:%s362]
                %380 = vst [vmem:[%s370 + $0x60] sm:%s362] %v379
                %v381 = vld [vmem:[%s369 + $0x78] sm:%s362]
                %382 = vst [vmem:[%s370 + $0x78] sm:%s362] %v381
                %v383 = vld [vmem:[%s369 + $0x90] sm:%s362]
                %384 = vst [vmem:[%s370 + $0x90] sm:%s362] %v383
                %v385 = vld [vmem:[%s369 + $0xa8] sm:%s362]
                %386 = vst [vmem:[%s370 + $0xa8] sm:%s362] %v385
                %v387 = vld [vmem:[%s369 + $0xc0] sm:%s362]
                %388 = vst [vmem:[%s370 + $0xc0] sm:%s362] %v387
                %v389 = vld [vmem:[%s369 + $0xd8] sm:%s362]
                %390 = vst [vmem:[%s370 + $0xd8] sm:%s362] %v389
              $region79: #{tpu_custom_call.1} parent=66 // loop_footer
                %s368 = sadd.s32 1, %s364
              $region80: #{tpu_custom_call.1} parent=66 // loop_footer_branch
                %363 = sbr.rel target = $region76
              $region81: #{tpu_custom_call.1} parent=66 // loop_exit
                _
            $region67: #{tpu_custom_call.1} parent=51 // pred_fallthru
              _
          $region52: #{tpu_custom_call.1} parent=47 // pred_fallthru
            _
          // Predicated region
          $region53: #{tpu_custom_call.1} parent=47 // pred_check
            %p270 = pneg %p266
          $region54: #{tpu_custom_call.1} parent=47 // pred_check_branch
            %272 = sbr.rel (%p270) target = $region56
          $region55: #{tpu_custom_call.1} parent=47 // pred_region
            %s273 = sshll.u32 1, 18
            %s274 = ssub.s32 %s273, 1
            loop: start=0, step=1, limit=1
            $region57: #{tpu_custom_call.1} parent=55 // loop_pre_header
              _
            $region58: #{tpu_custom_call.1} parent=55 // loop_header
              %s276 = sphi 0, %s280
              %p277 = scmp.ge.s32.totalorder %s276, 1
              %s281 = sphi %s264, %s264
              %s282 = sphi [#allocation2], [#allocation2]
            $region59: #{tpu_custom_call.1} parent=55 // loop_header_branch
              %279 = sbr.rel (%p277) target = $region63
            $region60: #{tpu_custom_call.1} parent=55 // loop_body
              %v283 = vld [vmem:[%s281] sm:%s274]
              %284 = vst [vmem:[%s282] sm:%s274] %v283
              %v285 = vld [vmem:[%s281 + $0x18] sm:%s274]
              %286 = vst [vmem:[%s282 + $0x18] sm:%s274] %v285
              %v287 = vld [vmem:[%s281 + $0x30] sm:%s274]
              %288 = vst [vmem:[%s282 + $0x30] sm:%s274] %v287
              %v289 = vld [vmem:[%s281 + $0x48] sm:%s274]
              %290 = vst [vmem:[%s282 + $0x48] sm:%s274] %v289
              %v291 = vld [vmem:[%s281 + $0x60] sm:%s274]
              %292 = vst [vmem:[%s282 + $0x60] sm:%s274] %v291
              %v293 = vld [vmem:[%s281 + $0x78] sm:%s274]
              %294 = vst [vmem:[%s282 + $0x78] sm:%s274] %v293
              %v295 = vld [vmem:[%s281 + $0x90] sm:%s274]
              %296 = vst [vmem:[%s282 + $0x90] sm:%s274] %v295
              %v297 = vld [vmem:[%s281 + $0xa8] sm:%s274]
              %298 = vst [vmem:[%s282 + $0xa8] sm:%s274] %v297
              %v299 = vld [vmem:[%s281 + $0xc0] sm:%s274]
              %300 = vst [vmem:[%s282 + $0xc0] sm:%s274] %v299
              %v301 = vld [vmem:[%s281 + $0xd8] sm:%s274]
              %302 = vst [vmem:[%s282 + $0xd8] sm:%s274] %v301
            $region61: #{tpu_custom_call.1} parent=55 // loop_footer
              %s280 = sadd.s32 1, %s276
            $region62: #{tpu_custom_call.1} parent=55 // loop_footer_branch
              %275 = sbr.rel target = $region58
            $region63: #{tpu_custom_call.1} parent=55 // loop_exit
              _
          $region56: #{tpu_custom_call.1} parent=47 // pred_fallthru
            _
          // Predicated region
          $region82: #{tpu_custom_call.1} parent=47 // pred_check
            _
          $region83: #{tpu_custom_call.1} parent=47 // pred_check_branch
            %393 = sbr.rel (0) target = $region85
          $region84: #{tpu_custom_call.1} parent=47 // pred_region
            %394 = vsyncadd [#allocation3], 2880
          $region85: #{tpu_custom_call.1} parent=47 // pred_fallthru
            _
        $region48: #{tpu_custom_call.1} parent=43 // pred_fallthru
          _
        %s395 = smul.u32 %s258, 240
        %s396 = scalar_lea.vmem [#allocation2], %s395
        %s397 = scalar_lea.sflag [#allocation3], %s258
        %s398 = smul.u32 10, 18
        %s399 = smul.u32 %s398, 1
        %s400 = sshll.u32 %s399, 4
        %401 = dma.done %s397, %s400
        %s402 = sadd.s32 %s26, 1
        %p403 = scmp.lt.s32.totalorder %s402, 2
        // Predicated region
        $region86: #{tpu_custom_call.1} parent=43 // pred_check
          %p404 = pneg %p403
        $region87: #{tpu_custom_call.1} parent=43 // pred_check_branch
          %406 = sbr.rel (%p404) target = $region89
        $region88: #{tpu_custom_call.1} parent=43 // pred_region
          %s407 = ssub.s32 1, %s258
          %s408 = smul.u32 %s402, 8
          %s409 = smul.u32 %s408, 24
          %s410 = smul.u32 %s25, 432
          %s411 = sadd.s32 %s409, %s410
          %s412 = scalar_lea.vmem %s0, %s411
          %s413 = smul.u32 %s407, 240
          %s414 = scalar_lea.vmem [#allocation2], %s413
          %s415 = scalar_lea.sflag [#allocation3], %s407
          %p417 = scmp.lt.u32.totalorder 18, 8
          %p418 = pneg %p417
          // Predicated region
          $region90: #{tpu_custom_call.1} parent=88 // pred_check
            _
          $region91: #{tpu_custom_call.1} parent=88 // pred_check_branch
            %420 = sbr.rel (%p417) target = $region93
          $region92: #{tpu_custom_call.1} parent=88 // pred_region
            %s454 = sand.u32 18, 7
            %p455 = scmp.eq.s32.totalorder %s454, 0
            %p456 = pneg %p455
            // Predicated region
            $region105: #{tpu_custom_call.1} parent=92 // pred_check
              _
            $region106: #{tpu_custom_call.1} parent=92 // pred_check_branch
              %458 = sbr.rel (%p455) target = $region108
            $region107: #{tpu_custom_call.1} parent=92 // pred_region
              %s459 = sand.u32 18, 7
              %s460 = ssub.s32 18, %s459
              %s461 = scalar_lea.vmem %s412, %s460
              %s462 = ssub.s32 18, %s459
              %s463 = scalar_lea.vmem %s414, %s462 [#allocation2]
              loop: start=0, step=1, limit=1
              $region109: #{tpu_custom_call.1} parent=107 // loop_pre_header
                _
              $region110: #{tpu_custom_call.1} parent=107 // loop_header
                %s465 = sphi 0, %s469
                %p466 = scmp.ge.s32.totalorder %s465, 1
                %s470 = sphi %s412, %s412
                %s471 = sphi %s414, %s414
              $region111: #{tpu_custom_call.1} parent=107 // loop_header_branch
                %468 = sbr.rel (%p466) target = $region115
              $region112: #{tpu_custom_call.1} parent=107 // loop_body
                %v472 = vld [vmem:[%s470] sm:$0xff]
                %473 = vst [vmem:[%s471] sm:$0xff] %v472
                %v474 = vld [vmem:[%s470 + $0x8] sm:$0xff]
                %475 = vst [vmem:[%s471 + $0x8] sm:$0xff] %v474
                %v476 = vld [vmem:[%s470 + $0x18] sm:$0xff]
                %477 = vst [vmem:[%s471 + $0x18] sm:$0xff] %v476
                %v478 = vld [vmem:[%s470 + $0x20] sm:$0xff]
                %479 = vst [vmem:[%s471 + $0x20] sm:$0xff] %v478
                %v480 = vld [vmem:[%s470 + $0x30] sm:$0xff]
                %481 = vst [vmem:[%s471 + $0x30] sm:$0xff] %v480
                %v482 = vld [vmem:[%s470 + $0x38] sm:$0xff]
                %483 = vst [vmem:[%s471 + $0x38] sm:$0xff] %v482
                %v484 = vld [vmem:[%s470 + $0x48] sm:$0xff]
                %485 = vst [vmem:[%s471 + $0x48] sm:$0xff] %v484
                %v486 = vld [vmem:[%s470 + $0x50] sm:$0xff]
                %487 = vst [vmem:[%s471 + $0x50] sm:$0xff] %v486
                %v488 = vld [vmem:[%s470 + $0x60] sm:$0xff]
                %489 = vst [vmem:[%s471 + $0x60] sm:$0xff] %v488
                %v490 = vld [vmem:[%s470 + $0x68] sm:$0xff]
                %491 = vst [vmem:[%s471 + $0x68] sm:$0xff] %v490
                %v492 = vld [vmem:[%s470 + $0x78] sm:$0xff]
                %493 = vst [vmem:[%s471 + $0x78] sm:$0xff] %v492
                %v494 = vld [vmem:[%s470 + $0x80] sm:$0xff]
                %495 = vst [vmem:[%s471 + $0x80] sm:$0xff] %v494
                %v496 = vld [vmem:[%s470 + $0x90] sm:$0xff]
                %497 = vst [vmem:[%s471 + $0x90] sm:$0xff] %v496
                %v498 = vld [vmem:[%s470 + $0x98] sm:$0xff]
                %499 = vst [vmem:[%s471 + $0x98] sm:$0xff] %v498
                %v500 = vld [vmem:[%s470 + $0xa8] sm:$0xff]
                %501 = vst [vmem:[%s471 + $0xa8] sm:$0xff] %v500
                %v502 = vld [vmem:[%s470 + $0xb0] sm:$0xff]
                %503 = vst [vmem:[%s471 + $0xb0] sm:$0xff] %v502
                %v504 = vld [vmem:[%s470 + $0xc0] sm:$0xff]
                %505 = vst [vmem:[%s471 + $0xc0] sm:$0xff] %v504
                %v506 = vld [vmem:[%s470 + $0xc8] sm:$0xff]
                %507 = vst [vmem:[%s471 + $0xc8] sm:$0xff] %v506
                %v508 = vld [vmem:[%s470 + $0xd8] sm:$0xff]
                %509 = vst [vmem:[%s471 + $0xd8] sm:$0xff] %v508
                %v510 = vld [vmem:[%s470 + $0xe0] sm:$0xff]
                %511 = vst [vmem:[%s471 + $0xe0] sm:$0xff] %v510
              $region113: #{tpu_custom_call.1} parent=107 // loop_footer
                %s469 = sadd.s32 1, %s465
              $region114: #{tpu_custom_call.1} parent=107 // loop_footer_branch
                %464 = sbr.rel target = $region110
              $region115: #{tpu_custom_call.1} parent=107 // loop_exit
                _
              %s512 = sshll.u32 1, %s459
              %s513 = ssub.s32 %s512, 1
              loop: start=0, step=1, limit=1
              $region116: #{tpu_custom_call.1} parent=107 // loop_pre_header
                _
              $region117: #{tpu_custom_call.1} parent=107 // loop_header
                %s515 = sphi 0, %s519
                %p516 = scmp.ge.s32.totalorder %s515, 1
                %s520 = sphi %s461, %s461
                %s521 = sphi %s463, %s463
              $region118: #{tpu_custom_call.1} parent=107 // loop_header_branch
                %518 = sbr.rel (%p516) target = $region122
              $region119: #{tpu_custom_call.1} parent=107 // loop_body
                %v522 = vld [vmem:[%s520] sm:%s513]
                %523 = vst [vmem:[%s521] sm:%s513] %v522
                %v524 = vld [vmem:[%s520 + $0x18] sm:%s513]
                %525 = vst [vmem:[%s521 + $0x18] sm:%s513] %v524
                %v526 = vld [vmem:[%s520 + $0x30] sm:%s513]
                %527 = vst [vmem:[%s521 + $0x30] sm:%s513] %v526
                %v528 = vld [vmem:[%s520 + $0x48] sm:%s513]
                %529 = vst [vmem:[%s521 + $0x48] sm:%s513] %v528
                %v530 = vld [vmem:[%s520 + $0x60] sm:%s513]
                %531 = vst [vmem:[%s521 + $0x60] sm:%s513] %v530
                %v532 = vld [vmem:[%s520 + $0x78] sm:%s513]
                %533 = vst [vmem:[%s521 + $0x78] sm:%s513] %v532
                %v534 = vld [vmem:[%s520 + $0x90] sm:%s513]
                %535 = vst [vmem:[%s521 + $0x90] sm:%s513] %v534
                %v536 = vld [vmem:[%s520 + $0xa8] sm:%s513]
                %537 = vst [vmem:[%s521 + $0xa8] sm:%s513] %v536
                %v538 = vld [vmem:[%s520 + $0xc0] sm:%s513]
                %539 = vst [vmem:[%s521 + $0xc0] sm:%s513] %v538
                %v540 = vld [vmem:[%s520 + $0xd8] sm:%s513]
                %541 = vst [vmem:[%s521 + $0xd8] sm:%s513] %v540
              $region120: #{tpu_custom_call.1} parent=107 // loop_footer
                %s519 = sadd.s32 1, %s515
              $region121: #{tpu_custom_call.1} parent=107 // loop_footer_branch
                %514 = sbr.rel target = $region117
              $region122: #{tpu_custom_call.1} parent=107 // loop_exit
                _
            $region108: #{tpu_custom_call.1} parent=92 // pred_fallthru
              _
          $region93: #{tpu_custom_call.1} parent=88 // pred_fallthru
            _
          // Predicated region
          $region94: #{tpu_custom_call.1} parent=88 // pred_check
            %p421 = pneg %p417
          $region95: #{tpu_custom_call.1} parent=88 // pred_check_branch
            %423 = sbr.rel (%p421) target = $region97
          $region96: #{tpu_custom_call.1} parent=88 // pred_region
            %s424 = sshll.u32 1, 18
            %s425 = ssub.s32 %s424, 1
            loop: start=0, step=1, limit=1
            $region98: #{tpu_custom_call.1} parent=96 // loop_pre_header
              _
            $region99: #{tpu_custom_call.1} parent=96 // loop_header
              %s427 = sphi 0, %s431
              %p428 = scmp.ge.s32.totalorder %s427, 1
              %s432 = sphi %s412, %s412
              %s433 = sphi %s414, %s414
            $region100: #{tpu_custom_call.1} parent=96 // loop_header_branch
              %430 = sbr.rel (%p428) target = $region104
            $region101: #{tpu_custom_call.1} parent=96 // loop_body
              %v434 = vld [vmem:[%s432] sm:%s425]
              %435 = vst [vmem:[%s433] sm:%s425] %v434
              %v436 = vld [vmem:[%s432 + $0x18] sm:%s425]
              %437 = vst [vmem:[%s433 + $0x18] sm:%s425] %v436
              %v438 = vld [vmem:[%s432 + $0x30] sm:%s425]
              %439 = vst [vmem:[%s433 + $0x30] sm:%s425] %v438
              %v440 = vld [vmem:[%s432 + $0x48] sm:%s425]
              %441 = vst [vmem:[%s433 + $0x48] sm:%s425] %v440
              %v442 = vld [vmem:[%s432 + $0x60] sm:%s425]
              %443 = vst [vmem:[%s433 + $0x60] sm:%s425] %v442
              %v444 = vld [vmem:[%s432 + $0x78] sm:%s425]
              %445 = vst [vmem:[%s433 + $0x78] sm:%s425] %v444
              %v446 = vld [vmem:[%s432 + $0x90] sm:%s425]
              %447 = vst [vmem:[%s433 + $0x90] sm:%s425] %v446
              %v448 = vld [vmem:[%s432 + $0xa8] sm:%s425]
              %449 = vst [vmem:[%s433 + $0xa8] sm:%s425] %v448
              %v450 = vld [vmem:[%s432 + $0xc0] sm:%s425]
              %451 = vst [vmem:[%s433 + $0xc0] sm:%s425] %v450
              %v452 = vld [vmem:[%s432 + $0xd8] sm:%s425]
              %453 = vst [vmem:[%s433 + $0xd8] sm:%s425] %v452
            $region102: #{tpu_custom_call.1} parent=96 // loop_footer
              %s431 = sadd.s32 1, %s427
            $region103: #{tpu_custom_call.1} parent=96 // loop_footer_branch
              %426 = sbr.rel target = $region99
            $region104: #{tpu_custom_call.1} parent=96 // loop_exit
              _
          $region97: #{tpu_custom_call.1} parent=88 // pred_fallthru
            _
          // Predicated region
          $region123: #{tpu_custom_call.1} parent=88 // pred_check
            _
          $region124: #{tpu_custom_call.1} parent=88 // pred_check_branch
            %544 = sbr.rel (0) target = $region126
          $region125: #{tpu_custom_call.1} parent=88 // pred_region
            %545 = vsyncadd %s415, 2880
          $region126: #{tpu_custom_call.1} parent=88 // pred_fallthru
            _
        $region89: #{tpu_custom_call.1} parent=43 // pred_fallthru
          _
        %v546 = vld [vmem:[%s396] sm:$0xff]
        %v547 = vld [vmem:[%s396 + $0x8] sm:$0xff]
        %v548 = vld [vmem:[%s396 + $0x10] sm:$0x3]
        %v549 = vld [vmem:[%s396 + $0x18] sm:$0xff]
        %v550 = vld [vmem:[%s396 + $0x20] sm:$0xff]
        %v551 = vld [vmem:[%s396 + $0x28] sm:$0x3]
        %v552 = vld [vmem:[%s396 + $0x30] sm:$0xff]
        %v553 = vld [vmem:[%s396 + $0x38] sm:$0xff]
        %v554 = vld [vmem:[%s396 + $0x40] sm:$0x3]
        %v555 = vld [vmem:[%s396 + $0x48] sm:$0xff]
        %v556 = vld [vmem:[%s396 + $0x50] sm:$0xff]
        %v557 = vld [vmem:[%s396 + $0x58] sm:$0x3]
        %v558 = vld [vmem:[%s396 + $0x60] sm:$0xff]
        %v559 = vld [vmem:[%s396 + $0x68] sm:$0xff]
        %v560 = vld [vmem:[%s396 + $0x70] sm:$0x3]
        %v561 = vld [vmem:[%s396 + $0x78] sm:$0xff]
        %v562 = vld [vmem:[%s396 + $0x80] sm:$0xff]
        %v563 = vld [vmem:[%s396 + $0x88] sm:$0x3]
        %v564 = vld [vmem:[%s396 + $0x90] sm:$0xff]
        %v565 = vld [vmem:[%s396 + $0x98] sm:$0xff]
        %v566 = vld [vmem:[%s396 + $0xa0] sm:$0x3]
        %v567 = vld [vmem:[%s396 + $0xa8] sm:$0xff]
        %v568 = vld [vmem:[%s396 + $0xb0] sm:$0xff]
        %v569 = vld [vmem:[%s396 + $0xb8] sm:$0x3]
        %v570 = vld [vmem:[%s396 + $0xc0] sm:$0xff]
        %v571 = vld [vmem:[%s396 + $0xc8] sm:$0xff]
        %v572 = vld [vmem:[%s396 + $0xd0] sm:$0x3]
        %v573 = vld [vmem:[%s396 + $0xd8] sm:$0xff]
        %v574 = vld [vmem:[%s396 + $0xe0] sm:$0xff]
        %v575 = vld [vmem:[%s396 + $0xe8] sm:$0x3]
        %v576 = vld [vmem:[%s1] sm:$0x7]
        %v577 = vld [vmem:[%s1 + $0x4] sm:$0x7]
        %v578 = vld [vmem:[%s1 + $0x8] sm:$0x7]
        %v579 = vlaneseq
        %v580 = vshrl.u32 %v579, 7
        %v581 = vsub.s32 0, %v580
        %v582 = vrot.slane %v576, %v581
        %v583 = vmul.f32 %v546, %v582
        %v584 = vmul.f32 %v547, %v582
        %v585 = vmul.f32 %v549, %v582
        %v586 = vmul.f32 %v550, %v582
        %v587 = vmul.f32 %v552, %v582
        %v588 = vmul.f32 %v553, %v582
        %v589 = vmul.f32 %v555, %v582
        %v590 = vmul.f32 %v556, %v582
        %v591 = vmul.f32 %v558, %v582
        %v592 = vmul.f32 %v559, %v582
        %v593 = vmul.f32 %v561, %v582
        %v594 = vmul.f32 %v562, %v582
        %v595 = vmul.f32 %v564, %v582
        %v596 = vmul.f32 %v565, %v582
        %v597 = vmul.f32 %v567, %v582
        %v598 = vmul.f32 %v568, %v582
        %v599 = vadd.f32 %v583, 0.0
        %v600 = vadd.f32 %v584, 0.0
        %v601 = vadd.f32 %v585, 0.0
        %v602 = vadd.f32 %v586, 0.0
        %v603 = vadd.f32 %v587, 0.0
        %v604 = vadd.f32 %v588, 0.0
        %v605 = vadd.f32 %v589, 0.0
        %v606 = vadd.f32 %v590, 0.0
        %v607 = vadd.f32 %v591, 0.0
        %v608 = vadd.f32 %v592, 0.0
        %v609 = vadd.f32 %v593, 0.0
        %v610 = vadd.f32 %v594, 0.0
        %v611 = vadd.f32 %v595, 0.0
        %v612 = vadd.f32 %v596, 0.0
        %v613 = vadd.f32 %v597, 0.0
        %v614 = vadd.f32 %v598, 0.0
        %v615 = vlaneseq
        %v616 = vshrl.u32 %v615, 7
        %v617 = vsub.s32 1, %v616
        %v618 = vrot.slane %v576, %v617
        %v619 = vmul.f32 %v546, %v618
        %v620 = vmul.f32 %v547, %v618
        %v621 = vmul.f32 %v548, %v618
        %v622 = vmul.f32 %v549, %v618
        %v623 = vmul.f32 %v550, %v618
        %v624 = vmul.f32 %v551, %v618
        %v625 = vmul.f32 %v552, %v618
        %v626 = vmul.f32 %v553, %v618
        %v627 = vmul.f32 %v554, %v618
        %v628 = vmul.f32 %v555, %v618
        %v629 = vmul.f32 %v556, %v618
        %v630 = vmul.f32 %v557, %v618
        %v631 = vmul.f32 %v558, %v618
        %v632 = vmul.f32 %v559, %v618
        %v633 = vmul.f32 %v560, %v618
        %v634 = vmul.f32 %v561, %v618
        %v635 = vmul.f32 %v562, %v618
        %v636 = vmul.f32 %v563, %v618
        %v637 = vmul.f32 %v564, %v618
        %v638 = vmul.f32 %v565, %v618
        %v639 = vmul.f32 %v566, %v618
        %v640 = vmul.f32 %v567, %v618
        %v641 = vmul.f32 %v568, %v618
        %v642 = vmul.f32 %v569, %v618
        %vm667 = vcmask 1046528
        %v668 = vrot.slane %v619, 1
        %v669 = vrot.slane %v620, 1
        %v670 = vsel %vm667, %v668, %v669
        %v671 = vrot.slane %v621, 1
        %v672 = vsel %vm667, %v669, %v671
        %v673 = vrot.slane %v622, 1
        %v674 = vrot.slane %v623, 1
        %v675 = vsel %vm667, %v673, %v674
        %v676 = vrot.slane %v624, 1
        %v677 = vsel %vm667, %v674, %v676
        %v678 = vrot.slane %v625, 1
        %v679 = vrot.slane %v626, 1
        %v680 = vsel %vm667, %v678, %v679
        %v681 = vrot.slane %v627, 1
        %v682 = vsel %vm667, %v679, %v681
        %v683 = vrot.slane %v628, 1
        %v684 = vrot.slane %v629, 1
        %v685 = vsel %vm667, %v683, %v684
        %v686 = vrot.slane %v630, 1
        %v687 = vsel %vm667, %v684, %v686
        %v688 = vrot.slane %v631, 1
        %v689 = vrot.slane %v632, 1
        %v690 = vsel %vm667, %v688, %v689
        %v691 = vrot.slane %v633, 1
        %v692 = vsel %vm667, %v689, %v691
        %v693 = vrot.slane %v634, 1
        %v694 = vrot.slane %v635, 1
        %v695 = vsel %vm667, %v693, %v694
        %v696 = vrot.slane %v636, 1
        %v697 = vsel %vm667, %v694, %v696
        %v698 = vrot.slane %v637, 1
        %v699 = vrot.slane %v638, 1
        %v700 = vsel %vm667, %v698, %v699
        %v701 = vrot.slane %v639, 1
        %v702 = vsel %vm667, %v699, %v701
        %v703 = vrot.slane %v640, 1
        %v704 = vrot.slane %v641, 1
        %v705 = vsel %vm667, %v703, %v704
        %v706 = vrot.slane %v642, 1
        %v707 = vsel %vm667, %v704, %v706
        %v724 = vadd.f32 %v599, %v670
        %v725 = vadd.f32 %v600, %v672
        %v726 = vadd.f32 %v601, %v675
        %v727 = vadd.f32 %v602, %v677
        %v728 = vadd.f32 %v603, %v680
        %v729 = vadd.f32 %v604, %v682
        %v730 = vadd.f32 %v605, %v685
        %v731 = vadd.f32 %v606, %v687
        %v732 = vadd.f32 %v607, %v690
        %v733 = vadd.f32 %v608, %v692
        %v734 = vadd.f32 %v609, %v695
        %v735 = vadd.f32 %v610, %v697
        %v736 = vadd.f32 %v611, %v700
        %v737 = vadd.f32 %v612, %v702
        %v738 = vadd.f32 %v613, %v705
        %v739 = vadd.f32 %v614, %v707
        %v740 = vlaneseq
        %v741 = vshrl.u32 %v740, 7
        %v742 = vsub.s32 2, %v741
        %v743 = vrot.slane %v576, %v742
        %v744 = vmul.f32 %v546, %v743
        %v745 = vmul.f32 %v547, %v743
        %v746 = vmul.f32 %v548, %v743
        %v747 = vmul.f32 %v549, %v743
        %v748 = vmul.f32 %v550, %v743
        %v749 = vmul.f32 %v551, %v743
        %v750 = vmul.f32 %v552, %v743
        %v751 = vmul.f32 %v553, %v743
        %v752 = vmul.f32 %v554, %v743
        %v753 = vmul.f32 %v555, %v743
        %v754 = vmul.f32 %v556, %v743
        %v755 = vmul.f32 %v557, %v743
        %v756 = vmul.f32 %v558, %v743
        %v757 = vmul.f32 %v559, %v743
        %v758 = vmul.f32 %v560, %v743
        %v759 = vmul.f32 %v561, %v743
        %v760 = vmul.f32 %v562, %v743
        %v761 = vmul.f32 %v563, %v743
        %v762 = vmul.f32 %v564, %v743
        %v763 = vmul.f32 %v565, %v743
        %v764 = vmul.f32 %v566, %v743
        %v765 = vmul.f32 %v567, %v743
        %v766 = vmul.f32 %v568, %v743
        %v767 = vmul.f32 %v569, %v743
        %vm792 = vcmask 1045504
        %v793 = vrot.slane %v744, 2
        %v794 = vrot.slane %v745, 2
        %v795 = vsel %vm792, %v793, %v794
        %v796 = vrot.slane %v746, 2
        %v797 = vsel %vm792, %v794, %v796
        %v798 = vrot.slane %v747, 2
        %v799 = vrot.slane %v748, 2
        %v800 = vsel %vm792, %v798, %v799
        %v801 = vrot.slane %v749, 2
        %v802 = vsel %vm792, %v799, %v801
        %v803 = vrot.slane %v750, 2
        %v804 = vrot.slane %v751, 2
        %v805 = vsel %vm792, %v803, %v804
        %v806 = vrot.slane %v752, 2
        %v807 = vsel %vm792, %v804, %v806
        %v808 = vrot.slane %v753, 2
        %v809 = vrot.slane %v754, 2
        %v810 = vsel %vm792, %v808, %v809
        %v811 = vrot.slane %v755, 2
        %v812 = vsel %vm792, %v809, %v811
        %v813 = vrot.slane %v756, 2
        %v814 = vrot.slane %v757, 2
        %v815 = vsel %vm792, %v813, %v814
        %v816 = vrot.slane %v758, 2
        %v817 = vsel %vm792, %v814, %v816
        %v818 = vrot.slane %v759, 2
        %v819 = vrot.slane %v760, 2
        %v820 = vsel %vm792, %v818, %v819
        %v821 = vrot.slane %v761, 2
        %v822 = vsel %vm792, %v819, %v821
        %v823 = vrot.slane %v762, 2
        %v824 = vrot.slane %v763, 2
        %v825 = vsel %vm792, %v823, %v824
        %v826 = vrot.slane %v764, 2
        %v827 = vsel %vm792, %v824, %v826
        %v828 = vrot.slane %v765, 2
        %v829 = vrot.slane %v766, 2
        %v830 = vsel %vm792, %v828, %v829
        %v831 = vrot.slane %v767, 2
        %v832 = vsel %vm792, %v829, %v831
        %v849 = vadd.f32 %v724, %v795
        %v850 = vadd.f32 %v725, %v797
        %v851 = vadd.f32 %v726, %v800
        %v852 = vadd.f32 %v727, %v802
        %v853 = vadd.f32 %v728, %v805
        %v854 = vadd.f32 %v729, %v807
        %v855 = vadd.f32 %v730, %v810
        %v856 = vadd.f32 %v731, %v812
        %v857 = vadd.f32 %v732, %v815
        %v858 = vadd.f32 %v733, %v817
        %v859 = vadd.f32 %v734, %v820
        %v860 = vadd.f32 %v735, %v822
        %v861 = vadd.f32 %v736, %v825
        %v862 = vadd.f32 %v737, %v827
        %v863 = vadd.f32 %v738, %v830
        %v864 = vadd.f32 %v739, %v832
        %v865 = vlaneseq
        %v866 = vshrl.u32 %v865, 7
        %v867 = vsub.s32 0, %v866
        %v868 = vrot.slane %v577, %v867
        %v869 = vmul.f32 %v549, %v868
        %v870 = vmul.f32 %v550, %v868
        %v871 = vmul.f32 %v552, %v868
        %v872 = vmul.f32 %v553, %v868
        %v873 = vmul.f32 %v555, %v868
        %v874 = vmul.f32 %v556, %v868
        %v875 = vmul.f32 %v558, %v868
        %v876 = vmul.f32 %v559, %v868
        %v877 = vmul.f32 %v561, %v868
        %v878 = vmul.f32 %v562, %v868
        %v879 = vmul.f32 %v564, %v868
        %v880 = vmul.f32 %v565, %v868
        %v881 = vmul.f32 %v567, %v868
        %v882 = vmul.f32 %v568, %v868
        %v883 = vmul.f32 %v570, %v868
        %v884 = vmul.f32 %v571, %v868
        %v885 = vadd.f32 %v849, %v869
        %v886 = vadd.f32 %v850, %v870
        %v887 = vadd.f32 %v851, %v871
        %v888 = vadd.f32 %v852, %v872
        %v889 = vadd.f32 %v853, %v873
        %v890 = vadd.f32 %v854, %v874
        %v891 = vadd.f32 %v855, %v875
        %v892 = vadd.f32 %v856, %v876
        %v893 = vadd.f32 %v857, %v877
        %v894 = vadd.f32 %v858, %v878
        %v895 = vadd.f32 %v859, %v879
        %v896 = vadd.f32 %v860, %v880
        %v897 = vadd.f32 %v861, %v881
        %v898 = vadd.f32 %v862, %v882
        %v899 = vadd.f32 %v863, %v883
        %v900 = vadd.f32 %v864, %v884
        %v901 = vlaneseq
        %v902 = vshrl.u32 %v901, 7
        %v903 = vsub.s32 1, %v902
        %v904 = vrot.slane %v577, %v903
        %v905 = vmul.f32 %v549, %v904
        %v906 = vmul.f32 %v550, %v904
        %v907 = vmul.f32 %v551, %v904
        %v908 = vmul.f32 %v552, %v904
        %v909 = vmul.f32 %v553, %v904
        %v910 = vmul.f32 %v554, %v904
        %v911 = vmul.f32 %v555, %v904
        %v912 = vmul.f32 %v556, %v904
        %v913 = vmul.f32 %v557, %v904
        %v914 = vmul.f32 %v558, %v904
        %v915 = vmul.f32 %v559, %v904
        %v916 = vmul.f32 %v560, %v904
        %v917 = vmul.f32 %v561, %v904
        %v918 = vmul.f32 %v562, %v904
        %v919 = vmul.f32 %v563, %v904
        %v920 = vmul.f32 %v564, %v904
        %v921 = vmul.f32 %v565, %v904
        %v922 = vmul.f32 %v566, %v904
        %v923 = vmul.f32 %v567, %v904
        %v924 = vmul.f32 %v568, %v904
        %v925 = vmul.f32 %v569, %v904
        %v926 = vmul.f32 %v570, %v904
        %v927 = vmul.f32 %v571, %v904
        %v928 = vmul.f32 %v572, %v904
        %v953 = vrot.slane %v905, 1
        %v954 = vrot.slane %v906, 1
        %v955 = vsel %vm667, %v953, %v954
        %v956 = vrot.slane %v907, 1
        %v957 = vsel %vm667, %v954, %v956
        %v958 = vrot.slane %v908, 1
        %v959 = vrot.slane %v909, 1
        %v960 = vsel %vm667, %v958, %v959
        %v961 = vrot.slane %v910, 1
        %v962 = vsel %vm667, %v959, %v961
        %v963 = vrot.slane %v911, 1
        %v964 = vrot.slane %v912, 1
        %v965 = vsel %vm667, %v963, %v964
        %v966 = vrot.slane %v913, 1
        %v967 = vsel %vm667, %v964, %v966
        %v968 = vrot.slane %v914, 1
        %v969 = vrot.slane %v915, 1
        %v970 = vsel %vm667, %v968, %v969
        %v971 = vrot.slane %v916, 1
        %v972 = vsel %vm667, %v969, %v971
        %v973 = vrot.slane %v917, 1
        %v974 = vrot.slane %v918, 1
        %v975 = vsel %vm667, %v973, %v974
        %v976 = vrot.slane %v919, 1
        %v977 = vsel %vm667, %v974, %v976
        %v978 = vrot.slane %v920, 1
        %v979 = vrot.slane %v921, 1
        %v980 = vsel %vm667, %v978, %v979
        %v981 = vrot.slane %v922, 1
        %v982 = vsel %vm667, %v979, %v981
        %v983 = vrot.slane %v923, 1
        %v984 = vrot.slane %v924, 1
        %v985 = vsel %vm667, %v983, %v984
        %v986 = vrot.slane %v925, 1
        %v987 = vsel %vm667, %v984, %v986
        %v988 = vrot.slane %v926, 1
        %v989 = vrot.slane %v927, 1
        %v990 = vsel %vm667, %v988, %v989
        %v991 = vrot.slane %v928, 1
        %v992 = vsel %vm667, %v989, %v991
        %v1009 = vadd.f32 %v885, %v955
        %v1010 = vadd.f32 %v886, %v957
        %v1011 = vadd.f32 %v887, %v960
        %v1012 = vadd.f32 %v888, %v962
        %v1013 = vadd.f32 %v889, %v965
        %v1014 = vadd.f32 %v890, %v967
        %v1015 = vadd.f32 %v891, %v970
        %v1016 = vadd.f32 %v892, %v972
        %v1017 = vadd.f32 %v893, %v975
        %v1018 = vadd.f32 %v894, %v977
        %v1019 = vadd.f32 %v895, %v980
        %v1020 = vadd.f32 %v896, %v982
        %v1021 = vadd.f32 %v897, %v985
        %v1022 = vadd.f32 %v898, %v987
        %v1023 = vadd.f32 %v899, %v990
        %v1024 = vadd.f32 %v900, %v992
        %v1025 = vlaneseq
        %v1026 = vshrl.u32 %v1025, 7
        %v1027 = vsub.s32 2, %v1026
        %v1028 = vrot.slane %v577, %v1027
        %v1029 = vmul.f32 %v549, %v1028
        %v1030 = vmul.f32 %v550, %v1028
        %v1031 = vmul.f32 %v551, %v1028
        %v1032 = vmul.f32 %v552, %v1028
        %v1033 = vmul.f32 %v553, %v1028
        %v1034 = vmul.f32 %v554, %v1028
        %v1035 = vmul.f32 %v555, %v1028
        %v1036 = vmul.f32 %v556, %v1028
        %v1037 = vmul.f32 %v557, %v1028
        %v1038 = vmul.f32 %v558, %v1028
        %v1039 = vmul.f32 %v559, %v1028
        %v1040 = vmul.f32 %v560, %v1028
        %v1041 = vmul.f32 %v561, %v1028
        %v1042 = vmul.f32 %v562, %v1028
        %v1043 = vmul.f32 %v563, %v1028
        %v1044 = vmul.f32 %v564, %v1028
        %v1045 = vmul.f32 %v565, %v1028
        %v1046 = vmul.f32 %v566, %v1028
        %v1047 = vmul.f32 %v567, %v1028
        %v1048 = vmul.f32 %v568, %v1028
        %v1049 = vmul.f32 %v569, %v1028
        %v1050 = vmul.f32 %v570, %v1028
        %v1051 = vmul.f32 %v571, %v1028
        %v1052 = vmul.f32 %v572, %v1028
        %v1077 = vrot.slane %v1029, 2
        %v1078 = vrot.slane %v1030, 2
        %v1079 = vsel %vm792, %v1077, %v1078
        %v1080 = vrot.slane %v1031, 2
        %v1081 = vsel %vm792, %v1078, %v1080
        %v1082 = vrot.slane %v1032, 2
        %v1083 = vrot.slane %v1033, 2
        %v1084 = vsel %vm792, %v1082, %v1083
        %v1085 = vrot.slane %v1034, 2
        %v1086 = vsel %vm792, %v1083, %v1085
        %v1087 = vrot.slane %v1035, 2
        %v1088 = vrot.slane %v1036, 2
        %v1089 = vsel %vm792, %v1087, %v1088
        %v1090 = vrot.slane %v1037, 2
        %v1091 = vsel %vm792, %v1088, %v1090
        %v1092 = vrot.slane %v1038, 2
        %v1093 = vrot.slane %v1039, 2
        %v1094 = vsel %vm792, %v1092, %v1093
        %v1095 = vrot.slane %v1040, 2
        %v1096 = vsel %vm792, %v1093, %v1095
        %v1097 = vrot.slane %v1041, 2
        %v1098 = vrot.slane %v1042, 2
        %v1099 = vsel %vm792, %v1097, %v1098
        %v1100 = vrot.slane %v1043, 2
        %v1101 = vsel %vm792, %v1098, %v1100
        %v1102 = vrot.slane %v1044, 2
        %v1103 = vrot.slane %v1045, 2
        %v1104 = vsel %vm792, %v1102, %v1103
        %v1105 = vrot.slane %v1046, 2
        %v1106 = vsel %vm792, %v1103, %v1105
        %v1107 = vrot.slane %v1047, 2
        %v1108 = vrot.slane %v1048, 2
        %v1109 = vsel %vm792, %v1107, %v1108
        %v1110 = vrot.slane %v1049, 2
        %v1111 = vsel %vm792, %v1108, %v1110
        %v1112 = vrot.slane %v1050, 2
        %v1113 = vrot.slane %v1051, 2
        %v1114 = vsel %vm792, %v1112, %v1113
        %v1115 = vrot.slane %v1052, 2
        %v1116 = vsel %vm792, %v1113, %v1115
        %v1133 = vadd.f32 %v1009, %v1079
        %v1134 = vadd.f32 %v1010, %v1081
        %v1135 = vadd.f32 %v1011, %v1084
        %v1136 = vadd.f32 %v1012, %v1086
        %v1137 = vadd.f32 %v1013, %v1089
        %v1138 = vadd.f32 %v1014, %v1091
        %v1139 = vadd.f32 %v1015, %v1094
        %v1140 = vadd.f32 %v1016, %v1096
        %v1141 = vadd.f32 %v1017, %v1099
        %v1142 = vadd.f32 %v1018, %v1101
        %v1143 = vadd.f32 %v1019, %v1104
        %v1144 = vadd.f32 %v1020, %v1106
        %v1145 = vadd.f32 %v1021, %v1109
        %v1146 = vadd.f32 %v1022, %v1111
        %v1147 = vadd.f32 %v1023, %v1114
        %v1148 = vadd.f32 %v1024, %v1116
        %v1149 = vlaneseq
        %v1150 = vshrl.u32 %v1149, 7
        %v1151 = vsub.s32 0, %v1150
        %v1152 = vrot.slane %v578, %v1151
        %v1153 = vmul.f32 %v552, %v1152
        %v1154 = vmul.f32 %v553, %v1152
        %v1155 = vmul.f32 %v555, %v1152
        %v1156 = vmul.f32 %v556, %v1152
        %v1157 = vmul.f32 %v558, %v1152
        %v1158 = vmul.f32 %v559, %v1152
        %v1159 = vmul.f32 %v561, %v1152
        %v1160 = vmul.f32 %v562, %v1152
        %v1161 = vmul.f32 %v564, %v1152
        %v1162 = vmul.f32 %v565, %v1152
        %v1163 = vmul.f32 %v567, %v1152
        %v1164 = vmul.f32 %v568, %v1152
        %v1165 = vmul.f32 %v570, %v1152
        %v1166 = vmul.f32 %v571, %v1152
        %v1167 = vmul.f32 %v573, %v1152
        %v1168 = vmul.f32 %v574, %v1152
        %v1169 = vadd.f32 %v1133, %v1153
        %v1170 = vadd.f32 %v1134, %v1154
        %v1171 = vadd.f32 %v1135, %v1155
        %v1172 = vadd.f32 %v1136, %v1156
        %v1173 = vadd.f32 %v1137, %v1157
        %v1174 = vadd.f32 %v1138, %v1158
        %v1175 = vadd.f32 %v1139, %v1159
        %v1176 = vadd.f32 %v1140, %v1160
        %v1177 = vadd.f32 %v1141, %v1161
        %v1178 = vadd.f32 %v1142, %v1162
        %v1179 = vadd.f32 %v1143, %v1163
        %v1180 = vadd.f32 %v1144, %v1164
        %v1181 = vadd.f32 %v1145, %v1165
        %v1182 = vadd.f32 %v1146, %v1166
        %v1183 = vadd.f32 %v1147, %v1167
        %v1184 = vadd.f32 %v1148, %v1168
        %v1185 = vlaneseq
        %v1186 = vshrl.u32 %v1185, 7
        %v1187 = vsub.s32 1, %v1186
        %v1188 = vrot.slane %v578, %v1187
        %v1189 = vmul.f32 %v552, %v1188
        %v1190 = vmul.f32 %v553, %v1188
        %v1191 = vmul.f32 %v554, %v1188
        %v1192 = vmul.f32 %v555, %v1188
        %v1193 = vmul.f32 %v556, %v1188
        %v1194 = vmul.f32 %v557, %v1188
        %v1195 = vmul.f32 %v558, %v1188
        %v1196 = vmul.f32 %v559, %v1188
        %v1197 = vmul.f32 %v560, %v1188
        %v1198 = vmul.f32 %v561, %v1188
        %v1199 = vmul.f32 %v562, %v1188
        %v1200 = vmul.f32 %v563, %v1188
        %v1201 = vmul.f32 %v564, %v1188
        %v1202 = vmul.f32 %v565, %v1188
        %v1203 = vmul.f32 %v566, %v1188
        %v1204 = vmul.f32 %v567, %v1188
        %v1205 = vmul.f32 %v568, %v1188
        %v1206 = vmul.f32 %v569, %v1188
        %v1207 = vmul.f32 %v570, %v1188
        %v1208 = vmul.f32 %v571, %v1188
        %v1209 = vmul.f32 %v572, %v1188
        %v1210 = vmul.f32 %v573, %v1188
        %v1211 = vmul.f32 %v574, %v1188
        %v1212 = vmul.f32 %v575, %v1188
        %v1237 = vrot.slane %v1189, 1
        %v1238 = vrot.slane %v1190, 1
        %v1239 = vsel %vm667, %v1237, %v1238
        %v1240 = vrot.slane %v1191, 1
        %v1241 = vsel %vm667, %v1238, %v1240
        %v1242 = vrot.slane %v1192, 1
        %v1243 = vrot.slane %v1193, 1
        %v1244 = vsel %vm667, %v1242, %v1243
        %v1245 = vrot.slane %v1194, 1
        %v1246 = vsel %vm667, %v1243, %v1245
        %v1247 = vrot.slane %v1195, 1
        %v1248 = vrot.slane %v1196, 1
        %v1249 = vsel %vm667, %v1247, %v1248
        %v1250 = vrot.slane %v1197, 1
        %v1251 = vsel %vm667, %v1248, %v1250
        %v1252 = vrot.slane %v1198, 1
        %v1253 = vrot.slane %v1199, 1
        %v1254 = vsel %vm667, %v1252, %v1253
        %v1255 = vrot.slane %v1200, 1
        %v1256 = vsel %vm667, %v1253, %v1255
        %v1257 = vrot.slane %v1201, 1
        %v1258 = vrot.slane %v1202, 1
        %v1259 = vsel %vm667, %v1257, %v1258
        %v1260 = vrot.slane %v1203, 1
        %v1261 = vsel %vm667, %v1258, %v1260
        %v1262 = vrot.slane %v1204, 1
        %v1263 = vrot.slane %v1205, 1
        %v1264 = vsel %vm667, %v1262, %v1263
        %v1265 = vrot.slane %v1206, 1
        %v1266 = vsel %vm667, %v1263, %v1265
        %v1267 = vrot.slane %v1207, 1
        %v1268 = vrot.slane %v1208, 1
        %v1269 = vsel %vm667, %v1267, %v1268
        %v1270 = vrot.slane %v1209, 1
        %v1271 = vsel %vm667, %v1268, %v1270
        %v1272 = vrot.slane %v1210, 1
        %v1273 = vrot.slane %v1211, 1
        %v1274 = vsel %vm667, %v1272, %v1273
        %v1275 = vrot.slane %v1212, 1
        %v1276 = vsel %vm667, %v1273, %v1275
        %v1293 = vadd.f32 %v1169, %v1239
        %v1294 = vadd.f32 %v1170, %v1241
        %v1295 = vadd.f32 %v1171, %v1244
        %v1296 = vadd.f32 %v1172, %v1246
        %v1297 = vadd.f32 %v1173, %v1249
        %v1298 = vadd.f32 %v1174, %v1251
        %v1299 = vadd.f32 %v1175, %v1254
        %v1300 = vadd.f32 %v1176, %v1256
        %v1301 = vadd.f32 %v1177, %v1259
        %v1302 = vadd.f32 %v1178, %v1261
        %v1303 = vadd.f32 %v1179, %v1264
        %v1304 = vadd.f32 %v1180, %v1266
        %v1305 = vadd.f32 %v1181, %v1269
        %v1306 = vadd.f32 %v1182, %v1271
        %v1307 = vadd.f32 %v1183, %v1274
        %v1308 = vadd.f32 %v1184, %v1276
        %v1309 = vlaneseq
        %v1310 = vshrl.u32 %v1309, 7
        %v1311 = vsub.s32 2, %v1310
        %v1312 = vrot.slane %v578, %v1311
        %v1313 = vmul.f32 %v552, %v1312
        %v1314 = vmul.f32 %v553, %v1312
        %v1315 = vmul.f32 %v554, %v1312
        %v1316 = vmul.f32 %v555, %v1312
        %v1317 = vmul.f32 %v556, %v1312
        %v1318 = vmul.f32 %v557, %v1312
        %v1319 = vmul.f32 %v558, %v1312
        %v1320 = vmul.f32 %v559, %v1312
        %v1321 = vmul.f32 %v560, %v1312
        %v1322 = vmul.f32 %v561, %v1312
        %v1323 = vmul.f32 %v562, %v1312
        %v1324 = vmul.f32 %v563, %v1312
        %v1325 = vmul.f32 %v564, %v1312
        %v1326 = vmul.f32 %v565, %v1312
        %v1327 = vmul.f32 %v566, %v1312
        %v1328 = vmul.f32 %v567, %v1312
        %v1329 = vmul.f32 %v568, %v1312
        %v1330 = vmul.f32 %v569, %v1312
        %v1331 = vmul.f32 %v570, %v1312
        %v1332 = vmul.f32 %v571, %v1312
        %v1333 = vmul.f32 %v572, %v1312
        %v1334 = vmul.f32 %v573, %v1312
        %v1335 = vmul.f32 %v574, %v1312
        %v1336 = vmul.f32 %v575, %v1312
        %v1361 = vrot.slane %v1313, 2
        %v1362 = vrot.slane %v1314, 2
        %v1363 = vsel %vm792, %v1361, %v1362
        %v1364 = vrot.slane %v1315, 2
        %v1365 = vsel %vm792, %v1362, %v1364
        %v1366 = vrot.slane %v1316, 2
        %v1367 = vrot.slane %v1317, 2
        %v1368 = vsel %vm792, %v1366, %v1367
        %v1369 = vrot.slane %v1318, 2
        %v1370 = vsel %vm792, %v1367, %v1369
        %v1371 = vrot.slane %v1319, 2
        %v1372 = vrot.slane %v1320, 2
        %v1373 = vsel %vm792, %v1371, %v1372
        %v1374 = vrot.slane %v1321, 2
        %v1375 = vsel %vm792, %v1372, %v1374
        %v1376 = vrot.slane %v1322, 2
        %v1377 = vrot.slane %v1323, 2
        %v1378 = vsel %vm792, %v1376, %v1377
        %v1379 = vrot.slane %v1324, 2
        %v1380 = vsel %vm792, %v1377, %v1379
        %v1381 = vrot.slane %v1325, 2
        %v1382 = vrot.slane %v1326, 2
        %v1383 = vsel %vm792, %v1381, %v1382
        %v1384 = vrot.slane %v1327, 2
        %v1385 = vsel %vm792, %v1382, %v1384
        %v1386 = vrot.slane %v1328, 2
        %v1387 = vrot.slane %v1329, 2
        %v1388 = vsel %vm792, %v1386, %v1387
        %v1389 = vrot.slane %v1330, 2
        %v1390 = vsel %vm792, %v1387, %v1389
        %v1391 = vrot.slane %v1331, 2
        %v1392 = vrot.slane %v1332, 2
        %v1393 = vsel %vm792, %v1391, %v1392
        %v1394 = vrot.slane %v1333, 2
        %v1395 = vsel %vm792, %v1392, %v1394
        %v1396 = vrot.slane %v1334, 2
        %v1397 = vrot.slane %v1335, 2
        %v1398 = vsel %vm792, %v1396, %v1397
        %v1399 = vrot.slane %v1336, 2
        %v1400 = vsel %vm792, %v1397, %v1399
        %v1417 = vadd.f32 %v1293, %v1363
        %v1418 = vadd.f32 %v1294, %v1365
        %v1419 = vadd.f32 %v1295, %v1368
        %v1420 = vadd.f32 %v1296, %v1370
        %v1421 = vadd.f32 %v1297, %v1373
        %v1422 = vadd.f32 %v1298, %v1375
        %v1423 = vadd.f32 %v1299, %v1378
        %v1424 = vadd.f32 %v1300, %v1380
        %v1425 = vadd.f32 %v1301, %v1383
        %v1426 = vadd.f32 %v1302, %v1385
        %v1427 = vadd.f32 %v1303, %v1388
        %v1428 = vadd.f32 %v1304, %v1390
        %v1429 = vadd.f32 %v1305, %v1393
        %v1430 = vadd.f32 %v1306, %v1395
        %v1431 = vadd.f32 %v1307, %v1398
        %v1432 = vadd.f32 %v1308, %v1400
        %v1433 = vld [vmem:[%s2] sm:$0x1]
        %v1435 = vlaneseq
        %v1436 = vshrl.u32 %v1435, 7
        %v1437 = vsub.s32 0, %v1436
        %v1438 = vrot.slane %v1433, %v1437
        %v1440 = vmul.f32 %v1417, %v1438
        %v1441 = vmul.f32 %v1418, %v1438
        %v1442 = vmul.f32 %v1419, %v1438
        %v1443 = vmul.f32 %v1420, %v1438
        %v1444 = vmul.f32 %v1421, %v1438
        %v1445 = vmul.f32 %v1422, %v1438
        %v1446 = vmul.f32 %v1423, %v1438
        %v1447 = vmul.f32 %v1424, %v1438
        %v1448 = vmul.f32 %v1425, %v1438
        %v1449 = vmul.f32 %v1426, %v1438
        %v1450 = vmul.f32 %v1427, %v1438
        %v1451 = vmul.f32 %v1428, %v1438
        %v1452 = vmul.f32 %v1429, %v1438
        %v1453 = vmul.f32 %v1430, %v1438
        %v1454 = vmul.f32 %v1431, %v1438
        %v1455 = vmul.f32 %v1432, %v1438
        %v1456 = vld [vmem:[%s3] sm:$0x1]
        %v1458 = vlaneseq
        %v1459 = vshrl.u32 %v1458, 7
        %v1460 = vsub.s32 0, %v1459
        %v1461 = vrot.slane %v1456, %v1460
        %v1463 = vadd.f32 %v1440, %v1461
        %v1464 = vadd.f32 %v1441, %v1461
        %v1465 = vadd.f32 %v1442, %v1461
        %v1466 = vadd.f32 %v1443, %v1461
        %v1467 = vadd.f32 %v1444, %v1461
        %v1468 = vadd.f32 %v1445, %v1461
        %v1469 = vadd.f32 %v1446, %v1461
        %v1470 = vadd.f32 %v1447, %v1461
        %v1471 = vadd.f32 %v1448, %v1461
        %v1472 = vadd.f32 %v1449, %v1461
        %v1473 = vadd.f32 %v1450, %v1461
        %v1474 = vadd.f32 %v1451, %v1461
        %v1475 = vadd.f32 %v1452, %v1461
        %v1476 = vadd.f32 %v1453, %v1461
        %v1477 = vadd.f32 %v1454, %v1461
        %v1478 = vadd.f32 %v1455, %v1461
        %v1479 = vmax.f32 %v1463, 0.0
        %v1480 = vmax.f32 %v1464, 0.0
        %v1481 = vmax.f32 %v1465, 0.0
        %v1482 = vmax.f32 %v1466, 0.0
        %v1483 = vmax.f32 %v1467, 0.0
        %v1484 = vmax.f32 %v1468, 0.0
        %v1485 = vmax.f32 %v1469, 0.0
        %v1486 = vmax.f32 %v1470, 0.0
        %v1487 = vmax.f32 %v1471, 0.0
        %v1488 = vmax.f32 %v1472, 0.0
        %v1489 = vmax.f32 %v1473, 0.0
        %v1490 = vmax.f32 %v1474, 0.0
        %v1491 = vmax.f32 %v1475, 0.0
        %v1492 = vmax.f32 %v1476, 0.0
        %v1493 = vmax.f32 %v1477, 0.0
        %v1494 = vmax.f32 %v1478, 0.0
        %v1495 = vpack.c.bf16 %v1480, %v1479
        %v1496 = vpack.c.bf16 %v1482, %v1481
        %v1497 = vpack.c.bf16 %v1484, %v1483
        %v1498 = vpack.c.bf16 %v1486, %v1485
        %v1499 = vpack.c.bf16 %v1488, %v1487
        %v1500 = vpack.c.bf16 %v1490, %v1489
        %v1501 = vpack.c.bf16 %v1492, %v1491
        %v1502 = vpack.c.bf16 %v1494, %v1493
        %v1503 = vld [vmem:[%s4] sm:$0xf]
        %v1504 = vld [vmem:[%s4 + $0x4] sm:$0xf]
        %v1505 = vld [vmem:[%s4 + $0x8] sm:$0xf]
        %v1506 = vld [vmem:[%s4 + $0xc] sm:$0xf]
        %v1507 = vld [vmem:[%s4 + $0x10] sm:$0xf]
        %v1508 = vld [vmem:[%s4 + $0x14] sm:$0xf]
        %v1509 = vld [vmem:[%s4 + $0x18] sm:$0xf]
        %v1510 = vld [vmem:[%s4 + $0x1c] sm:$0xf]
        %v1511 = vld [vmem:[%s4 + $0x20] sm:$0xf]
        %v1512 = vld [vmem:[%s4 + $0x24] sm:$0xf]
        %v1513 = vld [vmem:[%s4 + $0x28] sm:$0xf]
        %v1514 = vld [vmem:[%s4 + $0x2c] sm:$0xf]
        %v1515 = vld [vmem:[%s4 + $0x30] sm:$0xf]
        %v1516 = vld [vmem:[%s4 + $0x34] sm:$0xf]
        %v1517 = vld [vmem:[%s4 + $0x38] sm:$0xf]
        %v1518 = vld [vmem:[%s4 + $0x3c] sm:$0xf]
        %v1535 = vunpack.c.l.b16 %v1503
        %v1536 = vunpack.c.l.b16 %v1504
        %v1537 = vunpack.c.l.b16 %v1505
        %v1538 = vunpack.c.l.b16 %v1506
        %v1539 = vunpack.c.l.b16 %v1507
        %v1540 = vunpack.c.l.b16 %v1508
        %v1541 = vunpack.c.l.b16 %v1509
        %v1542 = vunpack.c.l.b16 %v1510
        %v1543 = vunpack.c.l.b16 %v1511
        %v1544 = vunpack.c.l.b16 %v1512
        %v1545 = vunpack.c.l.b16 %v1513
        %v1546 = vunpack.c.l.b16 %v1514
        %v1547 = vunpack.c.l.b16 %v1515
        %v1548 = vunpack.c.l.b16 %v1516
        %v1549 = vunpack.c.l.b16 %v1517
        %v1550 = vunpack.c.l.b16 %v1518
        %v1551 = vpack.c.b16 %v1536, %v1535
        %v1552 = vpack.c.b16 %v1538, %v1537
        %v1553 = vpack.c.b16 %v1540, %v1539
        %v1554 = vpack.c.b16 %v1542, %v1541
        %v1555 = vpack.c.b16 %v1544, %v1543
        %v1556 = vpack.c.b16 %v1546, %v1545
        %v1557 = vpack.c.b16 %v1548, %v1547
        %v1558 = vpack.c.b16 %v1550, %v1549
        %1567 = vmatprep.subr.bf16.mxu0 0
        %1568 = vmatpush1.bf16.msra.mxu0 %v1558
        %1569 = vmatprep.subr.bf16.mxu0 0
        %1570 = vmatpush1.bf16.msra.mxu0 %v1557
        %1571 = vmatprep.subr.bf16.mxu0 0
        %1572 = vmatpush1.bf16.msra.mxu0 %v1556
        %1573 = vmatprep.subr.bf16.mxu0 0
        %1574 = vmatpush1.bf16.msra.mxu0 %v1555
        %1575 = vmatprep.subr.bf16.mxu0 0
        %1576 = vmatpush1.bf16.msra.mxu0 %v1554
        %1577 = vmatprep.subr.bf16.mxu0 0
        %1578 = vmatpush1.bf16.msra.mxu0 %v1553
        %1579 = vmatprep.subr.bf16.mxu0 0
        %1580 = vmatpush1.bf16.msra.mxu0 %v1552
        %1581 = vmatprep.subr.bf16.mxu0 0
        %1582 = vmatpush1.bf16.msra.mxu0 %v1551
        %1583 = vmatprep.subr.bf16.mxu0 0
        %1584 = vmatpush2.bf16.msra.mxu0 0
        %1585 = vmatprep.subr.bf16.mxu0 0
        %1586 = vmatpush2.bf16.msra.mxu0 0
        %1587 = vmatprep.subr.bf16.mxu0 0
        %1588 = vmatpush2.bf16.msra.mxu0 0
        %1589 = vmatprep.subr.bf16.mxu0 0
        %1590 = vmatpush2.bf16.msra.mxu0 0
        %1591 = vmatprep.subr.bf16.mxu0 0
        %1592 = vmatpush2.bf16.msra.mxu0 0
        %1593 = vmatprep.subr.bf16.mxu0 0
        %1594 = vmatpush2.bf16.msra.mxu0 0
        %1595 = vmatprep.subr.bf16.mxu0 0
        %1596 = vmatpush2.bf16.msra.mxu0 0
        %1597 = vmatprep.subr.bf16.mxu0 0
        %1598 = vmatpush2.bf16.msra.mxu0 0
        %1599 = vmatprep.mubr.bf16.mxu0 0
        %1600 = vmatmul.mubr.bf16.gmra.mxu0 %v1495
        %v1601 = vpop.f32.mrf.mxu0
        %v1602 = vadd.f32 0.0, %v1601
        %v1603 = vpop.f32.mrf.mxu0
        %v1604 = vpop.f32.mrf.mxu0
        %v1605 = vadd.f32 0.0, %v1604
        %v1606 = vpop.f32.mrf.mxu0
        %1607 = vmatprep.mubr.bf16.mxu0 0
        %1608 = vmatmul.mubr.bf16.gmra.mxu0 %v1496
        %v1609 = vpop.f32.mrf.mxu0
        %v1610 = vadd.f32 0.0, %v1609
        %v1611 = vpop.f32.mrf.mxu0
        %v1612 = vpop.f32.mrf.mxu0
        %v1613 = vadd.f32 0.0, %v1612
        %v1614 = vpop.f32.mrf.mxu0
        %1615 = vmatprep.mubr.bf16.mxu0 0
        %1616 = vmatmul.mubr.bf16.gmra.mxu0 %v1497
        %v1617 = vpop.f32.mrf.mxu0
        %v1618 = vadd.f32 0.0, %v1617
        %v1619 = vpop.f32.mrf.mxu0
        %v1620 = vpop.f32.mrf.mxu0
        %v1621 = vadd.f32 0.0, %v1620
        %v1622 = vpop.f32.mrf.mxu0
        %1623 = vmatprep.mubr.bf16.mxu0 0
        %1624 = vmatmul.mubr.bf16.gmra.mxu0 %v1498
        %v1625 = vpop.f32.mrf.mxu0
        %v1626 = vadd.f32 0.0, %v1625
        %v1627 = vpop.f32.mrf.mxu0
        %v1628 = vpop.f32.mrf.mxu0
        %v1629 = vadd.f32 0.0, %v1628
        %v1630 = vpop.f32.mrf.mxu0
        %1631 = vmatprep.mubr.bf16.mxu0 0
        %1632 = vmatmul.mubr.bf16.gmra.mxu0 %v1499
        %v1633 = vpop.f32.mrf.mxu0
        %v1634 = vadd.f32 0.0, %v1633
        %v1635 = vpop.f32.mrf.mxu0
        %v1636 = vpop.f32.mrf.mxu0
        %v1637 = vadd.f32 0.0, %v1636
        %v1638 = vpop.f32.mrf.mxu0
        %1639 = vmatprep.mubr.bf16.mxu0 0
        %1640 = vmatmul.mubr.bf16.gmra.mxu0 %v1500
        %v1641 = vpop.f32.mrf.mxu0
        %v1642 = vadd.f32 0.0, %v1641
        %v1643 = vpop.f32.mrf.mxu0
        %v1644 = vpop.f32.mrf.mxu0
        %v1645 = vadd.f32 0.0, %v1644
        %v1646 = vpop.f32.mrf.mxu0
        %1647 = vmatprep.mubr.bf16.mxu0 0
        %1648 = vmatmul.mubr.bf16.gmra.mxu0 %v1501
        %v1649 = vpop.f32.mrf.mxu0
        %v1650 = vadd.f32 0.0, %v1649
        %v1651 = vpop.f32.mrf.mxu0
        %v1652 = vpop.f32.mrf.mxu0
        %v1653 = vadd.f32 0.0, %v1652
        %v1654 = vpop.f32.mrf.mxu0
        %1655 = vmatprep.mubr.bf16.mxu0 0
        %1656 = vmatmul.mubr.bf16.gmra.mxu0 %v1502
        %v1657 = vpop.f32.mrf.mxu0
        %v1658 = vadd.f32 0.0, %v1657
        %v1659 = vpop.f32.mrf.mxu0
        %v1660 = vpop.f32.mrf.mxu0
        %v1661 = vadd.f32 0.0, %v1660
        %v1662 = vpop.f32.mrf.mxu0
        %1663 = vdwg.mxu0
        %v1664 = vld [vmem:[%s5] sm:$0x1]
        %v1666 = vlaneseq
        %v1667 = vshrl.u32 %v1666, 7
        %v1668 = vsub.s32 0, %v1667
        %v1669 = vrot.slane %v1664, %v1668
        %v1671 = vmul.f32 %v1602, %v1669
        %v1672 = vmul.f32 %v1605, %v1669
        %v1673 = vmul.f32 %v1610, %v1669
        %v1674 = vmul.f32 %v1613, %v1669
        %v1675 = vmul.f32 %v1618, %v1669
        %v1676 = vmul.f32 %v1621, %v1669
        %v1677 = vmul.f32 %v1626, %v1669
        %v1678 = vmul.f32 %v1629, %v1669
        %v1679 = vmul.f32 %v1634, %v1669
        %v1680 = vmul.f32 %v1637, %v1669
        %v1681 = vmul.f32 %v1642, %v1669
        %v1682 = vmul.f32 %v1645, %v1669
        %v1683 = vmul.f32 %v1650, %v1669
        %v1684 = vmul.f32 %v1653, %v1669
        %v1685 = vmul.f32 %v1658, %v1669
        %v1686 = vmul.f32 %v1661, %v1669
        %v1687 = vld [vmem:[%s6] sm:$0x1]
        %v1689 = vlaneseq
        %v1690 = vshrl.u32 %v1689, 7
        %v1691 = vsub.s32 0, %v1690
        %v1692 = vrot.slane %v1687, %v1691
        %v1694 = vadd.f32 %v1671, %v1692
        %v1695 = vadd.f32 %v1672, %v1692
        %v1696 = vadd.f32 %v1673, %v1692
        %v1697 = vadd.f32 %v1674, %v1692
        %v1698 = vadd.f32 %v1675, %v1692
        %v1699 = vadd.f32 %v1676, %v1692
        %v1700 = vadd.f32 %v1677, %v1692
        %v1701 = vadd.f32 %v1678, %v1692
        %v1702 = vadd.f32 %v1679, %v1692
        %v1703 = vadd.f32 %v1680, %v1692
        %v1704 = vadd.f32 %v1681, %v1692
        %v1705 = vadd.f32 %v1682, %v1692
        %v1706 = vadd.f32 %v1683, %v1692
        %v1707 = vadd.f32 %v1684, %v1692
        %v1708 = vadd.f32 %v1685, %v1692
        %v1709 = vadd.f32 %v1686, %v1692
        %v1710 = vmax.f32 %v1694, 0.0
        %v1711 = vmax.f32 %v1695, 0.0
        %v1712 = vmax.f32 %v1696, 0.0
        %v1713 = vmax.f32 %v1697, 0.0
        %v1714 = vmax.f32 %v1698, 0.0
        %v1715 = vmax.f32 %v1699, 0.0
        %v1716 = vmax.f32 %v1700, 0.0
        %v1717 = vmax.f32 %v1701, 0.0
        %v1718 = vmax.f32 %v1702, 0.0
        %v1719 = vmax.f32 %v1703, 0.0
        %v1720 = vmax.f32 %v1704, 0.0
        %v1721 = vmax.f32 %v1705, 0.0
        %v1722 = vmax.f32 %v1706, 0.0
        %v1723 = vmax.f32 %v1707, 0.0
        %v1724 = vmax.f32 %v1708, 0.0
        %v1725 = vmax.f32 %v1709, 0.0
        %1726 = vst [vmem:[%s244] sm:$0xff] %v1710
        %1727 = vst [vmem:[%s244 + $0x8] sm:$0xff] %v1711
        %1728 = vst [vmem:[%s244 + $0x10] sm:$0xff] %v1712
        %1729 = vst [vmem:[%s244 + $0x18] sm:$0xff] %v1713
        %1730 = vst [vmem:[%s244 + $0x20] sm:$0xff] %v1714
        %1731 = vst [vmem:[%s244 + $0x28] sm:$0xff] %v1715
        %1732 = vst [vmem:[%s244 + $0x30] sm:$0xff] %v1716
        %1733 = vst [vmem:[%s244 + $0x38] sm:$0xff] %v1717
        %1734 = vst [vmem:[%s244 + $0x40] sm:$0xff] %v1718
        %1735 = vst [vmem:[%s244 + $0x48] sm:$0xff] %v1719
        %1736 = vst [vmem:[%s244 + $0x50] sm:$0xff] %v1720
        %1737 = vst [vmem:[%s244 + $0x58] sm:$0xff] %v1721
        %1738 = vst [vmem:[%s244 + $0x60] sm:$0xff] %v1722
        %1739 = vst [vmem:[%s244 + $0x68] sm:$0xff] %v1723
        %1740 = vst [vmem:[%s244 + $0x70] sm:$0xff] %v1724
        %1741 = vst [vmem:[%s244 + $0x78] sm:$0xff] %v1725
        %s1742 = sand.u32 %s169, 1
        %s1743 = scalar_lea.sflag [#allocation5], %s1742
        %s1744 = sand.u32 %s169, 1
        %s1745 = smul.addr %s1744, 128
        %s1746 = scalar_lea.vmem [#allocation4], %s1745
        // Predicated region
        $region127: #{tpu_custom_call.1} parent=43 // pred_check
          %p1747 = pneg %p179
        $region128: #{tpu_custom_call.1} parent=43 // pred_check_branch
          %1749 = sbr.rel (%p1747) target = $region130
        $region129: #{tpu_custom_call.1} parent=43 // pred_region
          %s1750 = smul.u32 8, %s26
          %s1752 = ssub.s32 2048, 2048
          %1753 = vsyncadd %s1743, %s1752
          %s1754 = smul.addr %s1750, 2
          %s1755 = smul.addr %s25, 32
          %s1756 = sadd.s32 %s1754, %s1755
          %s1757 = smul.addr %s1756, 128
          %s1758 = scalar_lea.hbm %s7, %s1757
          %s1759 = sshll.u32 %s1746, 4
          %s1760 = int_to_ptr.vmem [resolvable:$true] %s1759
          %1765 = dma.vmem_to_hbm [thread:$0]  %s1760, 2048, %s1758, %s1743, 128, 128, 8
        $region130: #{tpu_custom_call.1} parent=43 // pred_fallthru
          _
      $region44: #{tpu_custom_call.1} parent=5 // pred_fallthru
        _
      %p1766 = scmp.le.s32.totalorder 2, %s16
      // Predicated region
      $region131: #{tpu_custom_call.1} parent=5 // pred_check
        %p1767 = pneg %p1766
      $region132: #{tpu_custom_call.1} parent=5 // pred_check_branch
        %1769 = sbr.rel (%p1767) target = $region134
      $region133: #{tpu_custom_call.1} parent=5 // pred_region
        %s1770 = ssub.s32 %s16, 2
        // Predicated region
        $region135: #{tpu_custom_call.1} parent=133 // pred_check
          %p1771 = pneg %p185
        $region136: #{tpu_custom_call.1} parent=133 // pred_check_branch
          %1773 = sbr.rel (%p1771) target = $region138
        $region137: #{tpu_custom_call.1} parent=133 // pred_region
          %s1774 = sand.u32 %s170, 1
          %s1775 = scalar_lea.sflag [#allocation5], %s1774
          %s1776 = sand.u32 %s170, 1
          %s1777 = smul.addr %s1776, 128
          %s1778 = scalar_lea.vmem [#allocation4], %s1777
          %1779 = dma.done %s1775, 2048
        $region138: #{tpu_custom_call.1} parent=133 // pred_fallthru
          _
      $region134: #{tpu_custom_call.1} parent=5 // pred_fallthru
        _
    $region6: #{tpu_custom_call.1} parent=1 // loop_footer
      %s20 = sadd.s32 1, %s16
    $region7: #{tpu_custom_call.1} parent=1 // loop_footer_branch
      %15 = sbr.rel target = $region3
    $region8: #{tpu_custom_call.1} parent=1 // loop_exit
      _
    %1780 = vsyncpa [#allocation5], 1
    %s1781 = scalar_lea.sflag [#allocation5], 1
    %1782 = vsyncpa %s1781, 1
  %1783 = vsyncmov [#allocation3]
  %s1784 = vpop.sfrf %1783
  %p1785 = scmp.eq.s32.totalorder %s1784, 0
  %p1786 = pneg %p1785
  %1788 = shalt.err (%p1786)
  %s1789 = scalar_lea.sflag [#allocation3], 1
  %1790 = vsyncmov %s1789
  %s1791 = vpop.sfrf %1790
  %p1792 = scmp.eq.s32.totalorder %s1791, 0
  %p1793 = pneg %p1792
  %1795 = shalt.err (%p1793)

</llo_original>
